<compile_context>
chip_gen: v7x
topology: tpu7x:2x2x1
jax: 0.10.0
libtpu: 0.0.40
codegen_flags: <defaults>
</compile_context>

<pallas_src>
import functools
import math

import jax
import jax.numpy as jnp
import numpy as np
from jax.experimental import pallas as pl
from jax.experimental.pallas import tpu as pltpu


# ---------------------------------------------------------------------------
# Pallas kernel: one (batch*expert, q-block) accumulates over kv-blocks
# ---------------------------------------------------------------------------
def _sparse_attn_kernel(q_ref, k_ref, v_ref, r_ref, b_ref, o_ref,
                        m_scr, l_scr, acc_scr, qg_scr, *, scale, block_k, exp_bf16):
    # q_ref : [tq, De_blk] bf16     k_ref/v_ref : [tk, De_blk] bf16
    # r_ref : [tq, 1] f32 (gate)    b_ref       : [1, N] f32 (additive mask bias, resident)
    # o_ref : [tq, De_blk]          scratch: m/l [tq,1] f32, acc [tq,De_blk] f32,
    #                                        qg [tq,De_blk] bf16 (gate-folded Q)
    ki = pl.program_id(2)
    g = r_ref[...]                                              # [tq, 1] f32 expert gate

    @pl.when(ki == 0)
    def _init():
        m_scr[...] = jnp.full_like(m_scr, -jnp.inf)
        l_scr[...] = jnp.zeros_like(l_scr)
        acc_scr[...] = jnp.zeros_like(acc_scr)
        # Loop-invariant in ki: fold the MoE gate and 1/sqrt(head_dim) into Q ONCE
        # (RowParallelMatmulWithMoE gating) instead of re-doing the upcast/mul/downcast
        # every kv step.
        qg_scr[...] = (q_ref[...].astype(jnp.float32) * (g * scale)).astype(qg_scr.dtype)

    # QK^T on this expert's feature slice (bf16 MXU, f32 accumulate).
    s = jax.lax.dot_general(
        qg_scr[...], k_ref[...], (((1,), (1,)), ((), ())),
        preferred_element_type=jnp.float32,
    )                                                           # [tq, tk]

    # Mask bias row is resident for the whole (b, e); slice this kv block's columns.
    start = pl.multiple_of(ki * block_k, block_k)
    s = s + b_ref[:, pl.ds(start, block_k)]                     # + (-1e6) * (1 - mask)

    # Online (flash-style) softmax; normalization deferred to the epilogue.
    m_prev = m_scr[...]
    m_new = jnp.maximum(m_prev, jnp.max(s, axis=-1, keepdims=True))
    alpha = jnp.exp(m_prev - m_new)
    s_shift = s - m_new
    if exp_bf16:
        # Small-De regime is EUP-exp-bound: bf16 exp doubles EUP throughput (v6e/v7x);
        # p is consumed by the bf16 PV matmul anyway.  l accumulates in f32.
        p = jnp.exp(s_shift.astype(jnp.bfloat16))               # [tq, tk] bf16
        p_sum = jnp.sum(p.astype(jnp.float32), axis=-1, keepdims=True)
        pv = jnp.dot(p, v_ref[...], preferred_element_type=jnp.float32)
    else:
        p = jnp.exp(s_shift)                                    # [tq, tk] f32
        p_sum = jnp.sum(p, axis=-1, keepdims=True)
        pv = jnp.dot(p.astype(v_ref.dtype), v_ref[...], preferred_element_type=jnp.float32)

    l_scr[...] = alpha * l_scr[...] + p_sum
    acc_scr[...] = alpha * acc_scr[...] + pv
    m_scr[...] = m_new

    @pl.when(ki == pl.num_programs(2) - 1)
    def _finalize():
        inv_l = pl.reciprocal(l_scr[...], approx=True)          # EUP slot, ~free
        # ColumnParallelMatmulWithMoE output gating (per-query route weight).
        o_ref[...] = (g * acc_scr[...] * inv_l).astype(o_ref.dtype)


# ---------------------------------------------------------------------------
# Tile selection / VMEM budgeting helpers
# ---------------------------------------------------------------------------
def _pick_tile(n, cap, align):
    """Largest `align`-multiple divisor of n that is <= cap (or n itself)."""
    if n <= cap:
        return n
    t = (cap // align) * align
    while t >= align:
        if n % t == 0:
            return t
        t -= align
    return n  # fall back to untiled


def _estimate_vmem_bytes(tq, tk, de_blk, n_bias, in_bytes, out_bytes):
    pad_lane = lambda x: ((x + 127) // 128) * 128
    pad_sub = lambda x: ((x + 7) // 8) * 8
    q = pad_sub(tq) * pad_lane(de_blk) * in_bytes
    k = pad_sub(tk) * pad_lane(de_blk) * in_bytes
    v = k
    r = pad_sub(tq) * pad_lane(1) * 4
    b = pad_sub(1) * pad_lane(n_bias) * 4
    o = pad_sub(tq) * pad_lane(de_blk) * out_bytes
    scratch = (2 * pad_sub(tq) * pad_lane(1) * 4        # m, l
               + pad_sub(tq) * pad_lane(de_blk) * 4     # acc (f32)
               + pad_sub(tq) * pad_lane(de_blk) * 2)    # gate-folded Q (bf16)
    # Mosaic-internal [tq, tk] f32 temporaries (scores, probs, broadcasts).
    tmp = 3 * pad_sub(tq) * pad_lane(tk) * 4
    return 2 * (q + k + v + r + b + o) + scratch + tmp  # x2 for double buffering


# ---------------------------------------------------------------------------
# Wrapper: layout plumbing + pallas_call
# ---------------------------------------------------------------------------
def sparse_attention(Q, K, V, route_mat, mask, *, num_heads, n_experts,
                     block_q=None, block_k=None, out_dtype=None,
                     exp_in_bf16=None, kv_buffers=2):
    B, N, Dm = Q.shape
    assert Dm % num_heads == 0 and Dm % n_experts == 0
    head_dim = Dm // num_heads
    De = Dm // n_experts
    E = n_experts
    BE = B * E
    scale = 1.0 / math.sqrt(head_dim)
    out_dtype = Q.dtype if out_dtype is None else out_dtype

    # Default q-tile raised to 512 (128-aligned): K/V are re-streamed per q-block, so
    # arithmetic intensity ~ tq FLOPs/byte; 512 clears the v6e/v7x memory-bound ridge.
    tq = block_q if block_q is not None else _pick_tile(N, 512, 128)
    tk = block_k if block_k is not None else _pick_tile(N, 512, 128)
    assert N % tq == 0 and N % tk == 0, "block sizes must divide N"
    n_q, n_k = N // tq, N // tk

    # Small auxiliary tensors (cheap XLA precompute, done once per call):
    route_be = route_mat.astype(jnp.float32).transpose(0, 2, 1).reshape(BE, N, 1)
    bias_be = ((mask.astype(jnp.float32) - 1.0) * 1000000.0).reshape(BE, 1, N)

    aligned = (De % 128 == 0)
    if aligned:
        # Lane-aligned expert slice: read the De-wide column block straight out of
        # [B, N, Dm] — no HBM reshape/transpose of Q/K/V.
        De_blk = De
        Qe = Q.astype(jnp.bfloat16)
        Ke = K.astype(jnp.bfloat16)
        Ve = V.astype(jnp.bfloat16)
        q_map = lambda be, qi, ki: (be // E, qi, be % E)
        k_map = lambda be, qi, ki: (be // E, ki, be % E)
    else:
        # Unaligned / small De fallback: per-expert slabs zero-padded up to a 128
        # multiple so every load, the PV matmul, and every store is lane-dense
        # (no masked vst.msk writeback); padding is sliced off in the wrapper.
        De_blk = ((De + 127) // 128) * 128

        def split_pad(x):   # [B, N, Dm] -> [B*E, N, De_blk] bf16
            x = x.reshape(B, N, E, De).transpose(0, 2, 1, 3).reshape(BE, N, De)
            x = jnp.pad(x, ((0, 0), (0, 0), (0, De_blk - De)))
            return x.astype(jnp.bfloat16)

        Qe, Ke, Ve = split_pad(Q), split_pad(K), split_pad(V)
        q_map = lambda be, qi, ki: (be, qi, 0)
        k_map = lambda be, qi, ki: (be, ki, 0)

    qspec = pl.BlockSpec((None, tq, De_blk), q_map)
    # kv_buffers > 2 (e.g. 3 on v5e) adds a pipeline buffer on the only per-step DMAs.
    kv_kwargs = {} if (kv_buffers is None or kv_buffers == 2) else dict(
        pipeline_mode=pl.Buffered(kv_buffers))
    kspec = pl.BlockSpec((None, tk, De_blk), k_map, **kv_kwargs)
    vspec = pl.BlockSpec((None, tk, De_blk), k_map, **kv_kwargs)
    rspec = pl.BlockSpec((None, tq, 1), lambda be, qi, ki: (be, qi, 0))
    # Full bias row resident per (b, e): index_map independent of qi/ki so no per-step DMA.
    bspec = pl.BlockSpec((None, 1, N), lambda be, qi, ki: (be, 0, 0))
    ospec = pl.BlockSpec((None, tq, De_blk), lambda be, qi, ki: (be, qi, 0))

    if exp_in_bf16 is None:
        exp_in_bf16 = De_blk <= 256   # EUP-bound regime; pass False on v5e (no bf16 EUP)

    kernel = functools.partial(_sparse_attn_kernel, scale=scale, block_k=tk,
                               exp_bf16=bool(exp_in_bf16))

    est = _estimate_vmem_bytes(tq, tk, De_blk, N, 2, jnp.dtype(out_dtype).itemsize)
    try:
        vmem_cap = int(pltpu.get_tpu_info().vmem_capacity_bytes)
    except Exception:
        vmem_cap = 64 * 1024 * 1024   # conservative: v7x per-TC VMEM
    budget = (vmem_cap * 3) // 4      # leave 25% headroom for compiler-internal scratch
    vmem_limit = int(min(max(2 * est, 32 * 1024 * 1024), budget))

    out = pl.pallas_call(
        kernel,
        out_shape=jax.ShapeDtypeStruct((BE, N, De_blk), out_dtype),
        grid_spec=pltpu.PrefetchScalarGridSpec(
            num_scalar_prefetch=0,
            grid=(BE, n_q, n_k),
            in_specs=[qspec, kspec, vspec, rspec, bspec],
            out_specs=ospec,
            scratch_shapes=[
                pltpu.VMEM((tq, 1), jnp.float32),        # running max m
                pltpu.VMEM((tq, 1), jnp.float32),        # running denom l
                pltpu.VMEM((tq, De_blk), jnp.float32),   # unnormalized accumulator
                pltpu.VMEM((tq, De_blk), jnp.bfloat16),  # gate-folded Q (loop-invariant)
            ],
        ),
        compiler_params=pltpu.CompilerParams(
            dimension_semantics=("parallel", "parallel", "arbitrary"),
            vmem_limit_bytes=vmem_limit,
        ),
    )(Qe, Ke, Ve, route_be, bias_be)

    out = out.reshape(B, E, N, De_blk)
    if De_blk != De:
        out = out[..., :De]
    return out


# ---------------------------------------------------------------------------
# Pure-JAX reference (same semantics, f32) for a correctness check
# ---------------------------------------------------------------------------
def sparse_attention_ref(Q, K, V, route_mat, mask, *, num_heads, n_experts):
    B, N, Dm = Q.shape
    head_dim = Dm // num_heads
    De = Dm // n_experts

    def split_experts(x):
        return x.reshape(B, N, n_experts, De).transpose(0, 2, 1, 3)

    Qe, Ke, Ve = split_experts(Q), split_experts(K), split_experts(V)
    g = route_mat.transpose(0, 2, 1)                          # [B, E, N]
    scores = jnp.einsum("beid,bejd->beij", Qe, Ke)            # RowParallelMatmulWithMoE
    scores = scores * g[:, :, :, None]
    dot = scores / math.sqrt(head_dim)
    dot = dot - 1000000.0 * (1.0 - mask[:, :, None, :])
    dot = jax.nn.softmax(dot, axis=-1)
    X = jnp.einsum("beij,bejd->beid", dot, Ve)                # ColumnParallelMatmulWithMoE
    X = X * g[:, :, :, None]
    return X


if __name__ == "__main__":
    # config: transformer_dim=32, num_heads=4 (-> head_dim=8), attn_n_experts=2,
    #         attention_dropout=0.0.  N=256 with 128-wide q/kv blocks so the
    #         online-softmax (multi kv-block) path is actually exercised.
    B, N, Dm = 2, 256, 32
    num_heads, n_experts = 4, 2

    key = jax.random.PRNGKey(0)
    kq, kk, kv, kr, km = jax.random.split(key, 5)
    Q = jax.random.normal(kq, (B, N, Dm), dtype=jnp.float32)
    K = jax.random.normal(kk, (B, N, Dm), dtype=jnp.float32)
    V = jax.random.normal(kv, (B, N, Dm), dtype=jnp.float32)
    route_mat = jax.nn.softmax(
        jax.random.normal(kr, (B, N, n_experts), dtype=jnp.float32), axis=-1
    )
    mask = (jax.random.uniform(km, (B, n_experts, N)) > 0.1).astype(jnp.float32)
    mask = mask.at[..., 0].set(1.0)  # guarantee at least one valid key per row

    out = sparse_attention(
        Q, K, V, route_mat, mask,
        num_heads=num_heads, n_experts=n_experts,
        block_q=128, block_k=128,
    )
    out = jax.block_until_ready(out)

    ref = sparse_attention_ref(
        Q, K, V, route_mat, mask, num_heads=num_heads, n_experts=n_experts
    )
    # bf16 MXU inputs + bf16 exp -> compare at bf16-appropriate tolerance.
    np.testing.assert_allclose(np.asarray(out), np.asarray(ref), atol=2e-2, rtol=2e-2)

    print("KERNEL_OK")
</pallas_src>

<mosaic_0001>
module attributes {stable_mosaic.version = 11 : i64} {
  func.func @_sparse_attn_kernel(%arg0: i32, %arg1: i32, %arg2: i32, %arg3: memref<1x128x128xbf16, #tpu.memory_space<vmem>>, %arg4: memref<1x128x128xbf16, #tpu.memory_space<vmem>>, %arg5: memref<1x128x128xbf16, #tpu.memory_space<vmem>>, %arg6: memref<1x128x1xf32, #tpu.memory_space<vmem>>, %arg7: memref<1x1x256xf32, #tpu.memory_space<vmem>>, %arg8: memref<1x128x128xf32, #tpu.memory_space<vmem>>, %arg9: memref<128x1xf32, #tpu.memory_space<vmem>>, %arg10: memref<128x1xf32, #tpu.memory_space<vmem>>, %arg11: memref<128x128xf32, #tpu.memory_space<vmem>>, %arg12: memref<128x128xbf16, #tpu.memory_space<vmem>>) attributes {dimension_semantics = [#tpu.dimension_semantics<parallel>, #tpu.dimension_semantics<parallel>, #tpu.dimension_semantics<arbitrary>], iteration_bounds = array<i64: 4, 2, 2>, scalar_prefetch = 0 : i64, scratch_operands = 4 : i64, tpu.core_type = #tpu.core_type<tc>, window_params = [{transform_indices = @transform_0, window_bounds = array<i64: 1, 128, 128>}, {transform_indices = @transform_1, window_bounds = array<i64: 1, 128, 128>}, {transform_indices = @transform_2, window_bounds = array<i64: 1, 128, 128>}, {transform_indices = @transform_3, window_bounds = array<i64: 1, 128, 1>}, {transform_indices = @transform_4, window_bounds = array<i64: 1, 1, 256>}, {transform_indices = @transform_5, window_bounds = array<i64: 1, 128, 128>}]} {
    %c0 = arith.constant 0 : index
    %c0_0 = arith.constant 0 : index
    %c0_1 = arith.constant 0 : index
    %0 = vector.load %arg6[%c0, %c0_0, %c0_1] : memref<1x128x1xf32, #tpu.memory_space<vmem>>, vector<1x128x1xf32>
    %1 = vector.shape_cast %0 : vector<1x128x1xf32> to vector<128x1xf32>
    %c0_i32 = arith.constant 0 : i32
    %2 = arith.cmpi eq, %arg2, %c0_i32 : i32
    %3 = arith.extui %2 : i1 to i32
    %c0_i32_2 = arith.constant 0 : i32
    %4 = arith.cmpi ne, %3, %c0_i32_2 : i32
    scf.if %4 {
      %cst_29 = arith.constant 0xFF800000 : f32
      %45 = vector.broadcast %cst_29 : f32 to vector<128x1xf32>
      %c0_30 = arith.constant 0 : index
      %c0_31 = arith.constant 0 : index
      %46 = vector.load %arg9[%c0_30, %c0_31] : memref<128x1xf32, #tpu.memory_space<vmem>>, vector<128x1xf32>
      tpu.vector_store %arg9[%c0_30, %c0_31], %45 {strides = array<i32>} : memref<128x1xf32, #tpu.memory_space<vmem>>, vector<128x1xf32>,
      %cst_32 = arith.constant 0.000000e+00 : f32
      %47 = vector.broadcast %cst_32 : f32 to vector<128x1xf32>
      %c0_33 = arith.constant 0 : index
      %c0_34 = arith.constant 0 : index
      %48 = vector.load %arg10[%c0_33, %c0_34] : memref<128x1xf32, #tpu.memory_space<vmem>>, vector<128x1xf32>
      tpu.vector_store %arg10[%c0_33, %c0_34], %47 {strides = array<i32>} : memref<128x1xf32, #tpu.memory_space<vmem>>, vector<128x1xf32>,
      %cst_35 = arith.constant 0.000000e+00 : f32
      %49 = vector.broadcast %cst_35 : f32 to vector<128x128xf32>
      %c0_36 = arith.constant 0 : index
      %c0_37 = arith.constant 0 : index
      %50 = vector.load %arg11[%c0_36, %c0_37] : memref<128x128xf32, #tpu.memory_space<vmem>>, vector<128x128xf32>
      tpu.vector_store %arg11[%c0_36, %c0_37], %49 {strides = array<i32>} : memref<128x128xf32, #tpu.memory_space<vmem>>, vector<128x128xf32>,
      %c0_38 = arith.constant 0 : index
      %c0_39 = arith.constant 0 : index
      %c0_40 = arith.constant 0 : index
      %51 = vector.load %arg3[%c0_38, %c0_39, %c0_40] : memref<1x128x128xbf16, #tpu.memory_space<vmem>>, vector<1x128x128xbf16>
      %52 = vector.shape_cast %51 : vector<1x128x128xbf16> to vector<128x128xbf16>
      %53 = arith.extf %52 : vector<128x128xbf16> to vector<128x128xf32>
      %cst_41 = arith.constant 0.353553385 : f32
      %54 = vector.broadcast %cst_41 : f32 to vector<128x1xf32>
      %55 = arith.mulf %1, %54 : vector<128x1xf32>
      %56 = vector.broadcast %55 : vector<128x1xf32> to vector<128x128xf32>
      %57 = arith.mulf %53, %56 : vector<128x128xf32>
      %58 = arith.truncf %57 : vector<128x128xf32> to vector<128x128xbf16>
      %c0_42 = arith.constant 0 : index
      %c0_43 = arith.constant 0 : index
      %59 = vector.load %arg12[%c0_42, %c0_43] : memref<128x128xbf16, #tpu.memory_space<vmem>>, vector<128x128xbf16>
      tpu.vector_store %arg12[%c0_42, %c0_43], %58 {strides = array<i32>} : memref<128x128xbf16, #tpu.memory_space<vmem>>, vector<128x128xbf16>,
    } else {
    }
    %c0_3 = arith.constant 0 : index
    %c0_4 = arith.constant 0 : index
    %5 = vector.load %arg12[%c0_3, %c0_4] : memref<128x128xbf16, #tpu.memory_space<vmem>>, vector<128x128xbf16>
    %c0_5 = arith.constant 0 : index
    %c0_6 = arith.constant 0 : index
    %c0_7 = arith.constant 0 : index
    %6 = vector.load %arg4[%c0_5, %c0_6, %c0_7] : memref<1x128x128xbf16, #tpu.memory_space<vmem>>, vector<1x128x128xbf16>
    %7 = vector.shape_cast %6 : vector<1x128x128xbf16> to vector<128x128xbf16>
    %cst = arith.constant dense<0.000000e+00> : vector<128x128xf32>
    %8 = tpu.matmul %5, %7, %cst {dimension_numbers = #tpu.dot_dimension_numbers<[1], [1], [0], [0], [0, 0, 1, 0], [], []>} : vector<128x128xbf16>, vector<128x128xbf16>, vector<128x128xf32> -> vector<128x128xf32>
    %c128_i32 = arith.constant 128 : i32
    %9 = arith.muli %arg2, %c128_i32 : i32
    %10 = tpu.assume_multiple %9, 128 : i32
    %c0_8 = arith.constant 0 : index
    %c0_9 = arith.constant 0 : index
    %11 = arith.index_cast %10 : i32 to index
    %12 = vector.load %arg7[%c0_8, %c0_9, %11] : memref<1x1x256xf32, #tpu.memory_space<vmem>>, vector<1x1x128xf32>
    %13 = vector.shape_cast %12 : vector<1x1x128xf32> to vector<1x128xf32>
    %14 = vector.broadcast %13 : vector<1x128xf32> to vector<128x128xf32>
    %15 = arith.addf %8, %14 : vector<128x128xf32>
    %c0_10 = arith.constant 0 : index
    %c0_11 = arith.constant 0 : index
    %16 = vector.load %arg9[%c0_10, %c0_11] : memref<128x1xf32, #tpu.memory_space<vmem>>, vector<128x1xf32>
    %cst_12 = arith.constant dense<0xFF800000> : vector<128xf32>
    %17 = vector.multi_reduction <maximumf>, %15, %cst_12 [1] : vector<128x128xf32> to vector<128xf32>
    %18 = vector.shape_cast %17 : vector<128xf32> to vector<128x1xf32>
    %19 = arith.maximumf %16, %18 : vector<128x1xf32>
    %20 = arith.subf %16, %19 : vector<128x1xf32>
    %21 = math.exp %20 : vector<128x1xf32>
    %22 = vector.broadcast %19 : vector<128x1xf32> to vector<128x128xf32>
    %23 = arith.subf %15, %22 : vector<128x128xf32>
    %24 = arith.truncf %23 : vector<128x128xf32> to vector<128x128xbf16>
    %25 = math.exp %24 : vector<128x128xbf16>
    %26 = arith.extf %25 : vector<128x128xbf16> to vector<128x128xf32>
    %cst_13 = arith.constant dense<0.000000e+00> : vector<128xf32>
    %27 = vector.multi_reduction <add>, %26, %cst_13 [1] : vector<128x128xf32> to vector<128xf32>
    %28 = vector.shape_cast %27 : vector<128xf32> to vector<128x1xf32>
    %c0_14 = arith.constant 0 : index
    %c0_15 = arith.constant 0 : index
    %c0_16 = arith.constant 0 : index
    %29 = vector.load %arg5[%c0_14, %c0_15, %c0_16] : memref<1x128x128xbf16, #tpu.memory_space<vmem>>, vector<1x128x128xbf16>
    %30 = vector.shape_cast %29 : vector<1x128x128xbf16> to vector<128x128xbf16>
    %cst_17 = arith.constant dense<0.000000e+00> : vector<128x128xf32>
    %31 = tpu.matmul %25, %30, %cst_17 {dimension_numbers = #tpu.dot_dimension_numbers<[1], [0], [0], [1], [0, 0, 1, 1], [], []>} : vector<128x128xbf16>, vector<128x128xbf16>, vector<128x128xf32> -> vector<128x128xf32>
    %c0_18 = arith.constant 0 : index
    %c0_19 = arith.constant 0 : index
    %32 = vector.load %arg10[%c0_18, %c0_19] : memref<128x1xf32, #tpu.memory_space<vmem>>, vector<128x1xf32>
    %33 = arith.mulf %21, %32 : vector<128x1xf32>
    %34 = arith.addf %33, %28 : vector<128x1xf32>
    %c0_20 = arith.constant 0 : index
    %c0_21 = arith.constant 0 : index
    %35 = vector.load %arg10[%c0_20, %c0_21] : memref<128x1xf32, #tpu.memory_space<vmem>>, vector<128x1xf32>
    tpu.vector_store %arg10[%c0_20, %c0_21], %34 {strides = array<i32>} : memref<128x1xf32, #tpu.memory_space<vmem>>, vector<128x1xf32>,
    %c0_22 = arith.constant 0 : index
    %c0_23 = arith.constant 0 : index
    %36 = vector.load %arg11[%c0_22, %c0_23] : memref<128x128xf32, #tpu.memory_space<vmem>>, vector<128x128xf32>
    %37 = vector.broadcast %21 : vector<128x1xf32> to vector<128x128xf32>
    %38 = arith.mulf %37, %36 : vector<128x128xf32>
    %39 = arith.addf %38, %31 : vector<128x128xf32>
    %c0_24 = arith.constant 0 : index
    %c0_25 = arith.constant 0 : index
    %40 = vector.load %arg11[%c0_24, %c0_25] : memref<128x128xf32, #tpu.memory_space<vmem>>, vector<128x128xf32>
    tpu.vector_store %arg11[%c0_24, %c0_25], %39 {strides = array<i32>} : memref<128x128xf32, #tpu.memory_space<vmem>>, vector<128x128xf32>,
    %c0_26 = arith.constant 0 : index
    %c0_27 = arith.constant 0 : index
    %41 = vector.load %arg9[%c0_26, %c0_27] : memref<128x1xf32, #tpu.memory_space<vmem>>, vector<128x1xf32>
    tpu.vector_store %arg9[%c0_26, %c0_27], %19 {strides = array<i32>} : memref<128x1xf32, #tpu.memory_space<vmem>>, vector<128x1xf32>,
    %c1_i32 = arith.constant 1 : i32
    %42 = arith.cmpi eq, %arg2, %c1_i32 : i32
    %43 = arith.extui %42 : i1 to i32
    %c0_i32_28 = arith.constant 0 : i32
    %44 = arith.cmpi ne, %43, %c0_i32_28 : i32
    scf.if %44 {
      %c0_29 = arith.constant 0 : index
      %c0_30 = arith.constant 0 : index
      %45 = vector.load %arg10[%c0_29, %c0_30] : memref<128x1xf32, #tpu.memory_space<vmem>>, vector<128x1xf32>
      %46 = tpu.reciprocal %45 {approx = true} : vector<128x1xf32> -> vector<128x1xf32>
      %c0_31 = arith.constant 0 : index
      %c0_32 = arith.constant 0 : index
      %47 = vector.load %arg11[%c0_31, %c0_32] : memref<128x128xf32, #tpu.memory_space<vmem>>, vector<128x128xf32>
      %48 = vector.broadcast %1 : vector<128x1xf32> to vector<128x128xf32>
      %49 = arith.mulf %48, %47 : vector<128x128xf32>
      %50 = vector.broadcast %46 : vector<128x1xf32> to vector<128x128xf32>
      %51 = arith.mulf %49, %50 : vector<128x128xf32>
      %c0_33 = arith.constant 0 : index
      %c0_34 = arith.constant 0 : index
      %c0_35 = arith.constant 0 : index
      %52 = vector.load %arg8[%c0_33, %c0_34, %c0_35] : memref<1x128x128xf32, #tpu.memory_space<vmem>>, vector<1x128x128xf32>
      %53 = vector.shape_cast %52 : vector<1x128x128xf32> to vector<128x128xf32>
      %54 = vector.shape_cast %51 : vector<128x128xf32> to vector<1x128x128xf32>
      tpu.vector_store %arg8[%c0_33, %c0_34, %c0_35], %54 {strides = array<i32>} : memref<1x128x128xf32, #tpu.memory_space<vmem>>, vector<1x128x128xf32>,
    } else {
    }
    return
  }
  func.func @transform_0(%arg0: i32, %arg1: i32, %arg2: i32) -> (i32, i32, i32) {
    %c0_i32 = arith.constant 0 : i32
    %c0_i32_0 = arith.constant 0 : i32
    return %arg0, %arg1, %c0_i32 : i32, i32, i32
  }
  func.func @transform_1(%arg0: i32, %arg1: i32, %arg2: i32) -> (i32, i32, i32) {
    %c0_i32 = arith.constant 0 : i32
    %c0_i32_0 = arith.constant 0 : i32
    return %arg0, %arg2, %c0_i32 : i32, i32, i32
  }
  func.func @transform_2(%arg0: i32, %arg1: i32, %arg2: i32) -> (i32, i32, i32) {
    %c0_i32 = arith.constant 0 : i32
    %c0_i32_0 = arith.constant 0 : i32
    return %arg0, %arg2, %c0_i32 : i32, i32, i32
  }
  func.func @transform_3(%arg0: i32, %arg1: i32, %arg2: i32) -> (i32, i32, i32) {
    %c0_i32 = arith.constant 0 : i32
    %c0_i32_0 = arith.constant 0 : i32
    return %arg0, %arg1, %c0_i32 : i32, i32, i32
  }
  func.func @transform_4(%arg0: i32, %arg1: i32, %arg2: i32) -> (i32, i32, i32) {
    %c0_i32 = arith.constant 0 : i32
    %c0_i32_0 = arith.constant 0 : i32
    %c0_i32_1 = arith.constant 0 : i32
    return %arg0, %c0_i32, %c0_i32_0 : i32, i32, i32
  }
  func.func @transform_5(%arg0: i32, %arg1: i32, %arg2: i32) -> (i32, i32, i32) {
    %c0_i32 = arith.constant 0 : i32
    %c0_i32_0 = arith.constant 0 : i32
    return %arg0, %arg1, %c0_i32 : i32, i32, i32
  }
}

</mosaic_0001>

<llo_original>
// kernel: tpu_custom_call.1
$region0: #{tpu_custom_call.1}
  #allocation0 [shape = 'u32[]', space=smem, size = 0x4, offset = 0x4, fixed_abs, tag = 'smem constant byte address 0x4 - core index']
  #allocation1 [shape = 'u32[144,128]{1,0:T(1,128)}', space=vmem, size = 0x12000, scoped, tag = 'internal scratch']
  #allocation2 [shape = 'f32[128,1]{1,0:T(8,128)}', space=vmem, size = 0x10000, scoped, tag = 'scratch operand']
  #allocation3 [shape = 'f32[128,1]{1,0:T(8,128)}', space=vmem, size = 0x10000, scoped, tag = 'scratch operand']
  #allocation4 [shape = 'f32[128,128]{1,0:T(8,128)}', space=vmem, size = 0x10000, scoped, tag = 'scratch operand']
  #allocation5 [shape = 'bf16[128,128]{1,0:T(16,128)(2,1)}', space=vmem, size = 0x8000, scoped, tag = 'scratch operand']
  %s0 = inlined_call_operand.vmem [shape: bf16[4,256,128], index: 0, kind: input, shape index: {}]
  %s1 = inlined_call_operand.vmem [shape: bf16[4,256,128], index: 1, kind: input, shape index: {}]
  %s2 = inlined_call_operand.hbm [shape: bf16[4,256,128], index: 2, kind: input, shape index: {}]
  %s3 = inlined_call_operand.vmem [shape: f32[4,256,1], index: 3, kind: input, shape index: {}]
  %s4 = inlined_call_operand.vmem [shape: f32[4,1,256], index: 4, kind: input, shape index: {}]
  %s5 = inlined_call_operand.hbm [shape: f32[4,256,128], index: 5, kind: output, shape index: {}]
  %s6 = sld [smem:[#allocation0]]
  $region65: #{tpu_custom_call.1} parent=0
    _
  %s8 = ssub.s32 1, %s6
  %s9 = scalar_select 0, %s8, %s6
  $region1: #{tpu_custom_call.1} parent=0
    #allocation6 [shape = 'u8[65536]{0}', space=vmem, size = 0x10000, scoped, tag = 'input window, operand 2']
    #allocation7 [shape = 's32[2]{0}', space=sflag, size = 0x8, scoped, tag = 'scoped memory for tpu_custom_call.1']
    #allocation8 [shape = 's32[2]{0}', space=sflag, size = 0x8, scoped, tag = 'scoped memory for tpu_custom_call.1']
    #allocation9 [shape = 'u8[131072]{0}', space=vmem, size = 0x20000, scoped, tag = 'output window, operand 0']
    %10 = vsyncpa [#allocation7], 0
    %s11 = scalar_lea.sflag [#allocation7], 1
    %12 = vsyncpa %s11, 0
    %13 = vsyncpa [#allocation8], 0
    %s14 = scalar_lea.sflag [#allocation8], 1
    %15 = vsyncpa %s14, 0
    loop: start=0, step=1, limit=18
    $region2: #{tpu_custom_call.1} parent=1 // loop_pre_header
      _
    $region3: #{tpu_custom_call.1} parent=1 // loop_header
      %s17 = sphi 0, %s21
      %p18 = scmp.ge.s32.totalorder %s17, 18
      %s24 = sphi 0, %s43
      %s25 = sphi 0, %s39
      %s26 = sphi 0, %s35
      %s27 = sphi 0, %s24
      %s28 = sphi 0, %s25
      %s29 = sphi 0, %s26
      %s30 = sphi 0, %s27
      %s31 = sphi 0, %s28
      %s32 = sphi 0, %s29
      %s48 = sphi 0, %s50
      %s51 = sphi 0, %s48
      %s52 = sphi 0, %s51
      %s68 = sphi 0, %s52
      %s76 = sphi 0, %s78
      %s79 = sphi 0, %s76
      %s80 = sphi 0, %s79
      %s96 = sphi 0, %s80
      %s104 = sphi 0, %s106
      %s107 = sphi 0, %s104
      %s108 = sphi 0, %s107
      %s124 = sphi 0, %s108
      %s132 = sphi 0, %s134
      %s135 = sphi 0, %s132
      %s136 = sphi 0, %s135
      %s152 = sphi 0, %s136
      %s158 = sphi 0, %s160
      %s161 = sphi 0, %s158
      %s162 = sphi 0, %s161
      %s178 = sphi 0, %s162
      %s186 = sphi 0, %s188
      %s189 = sphi 0, %s186
      %s190 = sphi 0, %s189
      %s206 = sphi 0, %s190
    $region4: #{tpu_custom_call.1} parent=1 // loop_header_branch
      %20 = sbr.rel (%p18) target = $region8
    $region5: #{tpu_custom_call.1} parent=1 // loop_body
      %s22 = ssub.s32 %s17, 1
      %s23 = ssub.s32 %s17, 2
      %s33 = sadd.s32 1, %s26
      %p34 = scmp.ge.s32.totalorder %s33, 2
      %s35 = scalar_select %p34, 0, %s33
      %s36 = sadd.s32 1, %s25
      %s37 = scalar_select %p34, %s36, %s25
      %p38 = scmp.ge.s32.totalorder %s37, 2
      %s39 = scalar_select %p38, 0, %s37
      %s40 = sadd.s32 1, %s24
      %s41 = scalar_select %p38, %s40, %s24
      %p42 = scmp.ge.s32.totalorder %s41, 4
      %s43 = scalar_select %p42, 0, %s41
      %s44 = ssub.s32 %s24, %s43
      %s45 = ssub.s32 %s25, %s39
      %s46 = sor.u32 %s44, %s45
      %p47 = scmp.eq.s32.totalorder %s46, 0
      %s49 = sadd.s32 %s48, 1
      %s50 = scalar_select %p47, %s48, %s49
      %p53 = pneg %p47
      %p54 = scmp.eq.s32.totalorder %s17, 15
      %p55 = por %p53, %p54
      %p56 = scmp.ne.s32.totalorder %s48, %s51
      %p57 = scmp.eq.s32.totalorder %s17, 0
      %p58 = por %p56, %p57
      %p59 = scmp.ne.s32.totalorder %s48, %s51
      %p60 = scmp.eq.s32.totalorder %s22, 15
      %p61 = por %p59, %p60
      %p62 = scmp.ne.s32.totalorder %s51, %s52
      %p63 = scmp.eq.s32.totalorder %s22, 0
      %p64 = por %p62, %p63
      %p65 = scmp.ne.s32.totalorder %s51, %s52
      %p66 = scmp.eq.s32.totalorder %s23, 15
      %p67 = por %p65, %p66
      %p69 = scmp.ne.s32.totalorder %s52, %s68
      %p70 = scmp.eq.s32.totalorder %s23, 0
      %p71 = por %p69, %p70
      %s72 = ssub.s32 %s24, %s43
      %s73 = ssub.s32 %s26, %s35
      %s74 = sor.u32 %s72, %s73
      %p75 = scmp.eq.s32.totalorder %s74, 0
      %s77 = sadd.s32 %s76, 1
      %s78 = scalar_select %p75, %s76, %s77
      %p81 = pneg %p75
      %p82 = scmp.eq.s32.totalorder %s17, 15
      %p83 = por %p81, %p82
      %p84 = scmp.ne.s32.totalorder %s76, %s79
      %p85 = scmp.eq.s32.totalorder %s17, 0
      %p86 = por %p84, %p85
      %p87 = scmp.ne.s32.totalorder %s76, %s79
      %p88 = scmp.eq.s32.totalorder %s22, 15
      %p89 = por %p87, %p88
      %p90 = scmp.ne.s32.totalorder %s79, %s80
      %p91 = scmp.eq.s32.totalorder %s22, 0
      %p92 = por %p90, %p91
      %p93 = scmp.ne.s32.totalorder %s79, %s80
      %p94 = scmp.eq.s32.totalorder %s23, 15
      %p95 = por %p93, %p94
      %p97 = scmp.ne.s32.totalorder %s80, %s96
      %p98 = scmp.eq.s32.totalorder %s23, 0
      %p99 = por %p97, %p98
      %s100 = ssub.s32 %s24, %s43
      %s101 = ssub.s32 %s26, %s35
      %s102 = sor.u32 %s100, %s101
      %p103 = scmp.eq.s32.totalorder %s102, 0
      %s105 = sadd.s32 %s104, 1
      %s106 = scalar_select %p103, %s104, %s105
      %p109 = pneg %p103
      %p110 = scmp.eq.s32.totalorder %s17, 15
      %p111 = por %p109, %p110
      %p112 = scmp.ne.s32.totalorder %s104, %s107
      %p113 = scmp.eq.s32.totalorder %s17, 0
      %p114 = por %p112, %p113
      %p115 = scmp.ne.s32.totalorder %s104, %s107
      %p116 = scmp.eq.s32.totalorder %s22, 15
      %p117 = por %p115, %p116
      %p118 = scmp.ne.s32.totalorder %s107, %s108
      %p119 = scmp.eq.s32.totalorder %s22, 0
      %p120 = por %p118, %p119
      %p121 = scmp.ne.s32.totalorder %s107, %s108
      %p122 = scmp.eq.s32.totalorder %s23, 15
      %p123 = por %p121, %p122
      %p125 = scmp.ne.s32.totalorder %s108, %s124
      %p126 = scmp.eq.s32.totalorder %s23, 0
      %p127 = por %p125, %p126
      %s128 = ssub.s32 %s24, %s43
      %s129 = ssub.s32 %s25, %s39
      %s130 = sor.u32 %s128, %s129
      %p131 = scmp.eq.s32.totalorder %s130, 0
      %s133 = sadd.s32 %s132, 1
      %s134 = scalar_select %p131, %s132, %s133
      %p137 = pneg %p131
      %p138 = scmp.eq.s32.totalorder %s17, 15
      %p139 = por %p137, %p138
      %p140 = scmp.ne.s32.totalorder %s132, %s135
      %p141 = scmp.eq.s32.totalorder %s17, 0
      %p142 = por %p140, %p141
      %p143 = scmp.ne.s32.totalorder %s132, %s135
      %p144 = scmp.eq.s32.totalorder %s22, 15
      %p145 = por %p143, %p144
      %p146 = scmp.ne.s32.totalorder %s135, %s136
      %p147 = scmp.eq.s32.totalorder %s22, 0
      %p148 = por %p146, %p147
      %p149 = scmp.ne.s32.totalorder %s135, %s136
      %p150 = scmp.eq.s32.totalorder %s23, 15
      %p151 = por %p149, %p150
      %p153 = scmp.ne.s32.totalorder %s136, %s152
      %p154 = scmp.eq.s32.totalorder %s23, 0
      %p155 = por %p153, %p154
      %s156 = ssub.s32 %s24, %s43
      %p157 = scmp.eq.s32.totalorder %s156, 0
      %s159 = sadd.s32 %s158, 1
      %s160 = scalar_select %p157, %s158, %s159
      %p163 = pneg %p157
      %p164 = scmp.eq.s32.totalorder %s17, 15
      %p165 = por %p163, %p164
      %p166 = scmp.ne.s32.totalorder %s158, %s161
      %p167 = scmp.eq.s32.totalorder %s17, 0
      %p168 = por %p166, %p167
      %p169 = scmp.ne.s32.totalorder %s158, %s161
      %p170 = scmp.eq.s32.totalorder %s22, 15
      %p171 = por %p169, %p170
      %p172 = scmp.ne.s32.totalorder %s161, %s162
      %p173 = scmp.eq.s32.totalorder %s22, 0
      %p174 = por %p172, %p173
      %p175 = scmp.ne.s32.totalorder %s161, %s162
      %p176 = scmp.eq.s32.totalorder %s23, 15
      %p177 = por %p175, %p176
      %p179 = scmp.ne.s32.totalorder %s162, %s178
      %p180 = scmp.eq.s32.totalorder %s23, 0
      %p181 = por %p179, %p180
      %s182 = ssub.s32 %s24, %s43
      %s183 = ssub.s32 %s25, %s39
      %s184 = sor.u32 %s182, %s183
      %p185 = scmp.eq.s32.totalorder %s184, 0
      %s187 = sadd.s32 %s186, 1
      %s188 = scalar_select %p185, %s186, %s187
      %p191 = pneg %p185
      %p192 = scmp.eq.s32.totalorder %s17, 15
      %p193 = por %p191, %p192
      %p194 = scmp.ne.s32.totalorder %s186, %s189
      %p195 = scmp.eq.s32.totalorder %s17, 0
      %p196 = por %p194, %p195
      %p197 = scmp.ne.s32.totalorder %s186, %s189
      %p198 = scmp.eq.s32.totalorder %s22, 15
      %p199 = por %p197, %p198
      %p200 = scmp.ne.s32.totalorder %s189, %s190
      %p201 = scmp.eq.s32.totalorder %s22, 0
      %p202 = por %p200, %p201
      %p203 = scmp.ne.s32.totalorder %s189, %s190
      %p204 = scmp.eq.s32.totalorder %s23, 15
      %p205 = por %p203, %p204
      %p207 = scmp.ne.s32.totalorder %s190, %s206
      %p208 = scmp.eq.s32.totalorder %s23, 0
      %p209 = por %p207, %p208
      %p210 = scmp.le.s32.totalorder 1, %s17
      %p211 = scmp.lt.s32.totalorder %s17, 17
      %p212 = pnand %p210, %p211
      %p213 = pneg %p212
      // Predicated region
      $region9: #{tpu_custom_call.1} parent=5 // pred_check
        _
      $region10: #{tpu_custom_call.1} parent=5 // pred_check_branch
        %215 = sbr.rel (%p212) target = $region12
      $region11: #{tpu_custom_call.1} parent=5 // pred_region
        %s216 = ssub.s32 %s17, 1
      $region12: #{tpu_custom_call.1} parent=5 // pred_fallthru
        _
      %p217 = scmp.lt.s32.totalorder %s17, 16
      // Predicated region
      $region13: #{tpu_custom_call.1} parent=5 // pred_check
        %p218 = pneg %p217
      $region14: #{tpu_custom_call.1} parent=5 // pred_check_branch
        %220 = sbr.rel (%p218) target = $region16
      $region15: #{tpu_custom_call.1} parent=5 // pred_region
        // Predicated region
        $region17: #{tpu_custom_call.1} parent=15 // pred_check
          %p221 = pneg %p58
        $region18: #{tpu_custom_call.1} parent=15 // pred_check_branch
          %223 = sbr.rel (%p221) target = $region20
        $region19: #{tpu_custom_call.1} parent=15 // pred_region
          %s224 = smul.u32 16, %s25
          %p225 = scmp.lt.s32.totalorder %s24, 3
          %s226 = scalar_select %p225, %s24, 3
          %p227 = scmp.lt.s32.totalorder %s224, 31
          %s228 = scalar_select %p227, %s224, 31
          %s229 = smul.addr %s226, 32
          %s230 = sadd.s32 %s228, %s229
          %s231 = smul.addr %s230, 4
          %s232 = scalar_lea.vmem %s0, %s231
          %s233 = smul.u32 16, %s25
        $region20: #{tpu_custom_call.1} parent=15 // pred_fallthru
          _
        // Predicated region
        $region21: #{tpu_custom_call.1} parent=15 // pred_check
          %p234 = pneg %p86
        $region22: #{tpu_custom_call.1} parent=15 // pred_check_branch
          %236 = sbr.rel (%p234) target = $region24
        $region23: #{tpu_custom_call.1} parent=15 // pred_region
          %s237 = smul.u32 16, %s26
          %p238 = scmp.lt.s32.totalorder %s24, 3
          %s239 = scalar_select %p238, %s24, 3
          %p240 = scmp.lt.s32.totalorder %s237, 31
          %s241 = scalar_select %p240, %s237, 31
          %s242 = smul.addr %s239, 32
          %s243 = sadd.s32 %s241, %s242
          %s244 = smul.addr %s243, 4
          %s245 = scalar_lea.vmem %s1, %s244
          %s246 = smul.u32 16, %s26
        $region24: #{tpu_custom_call.1} parent=15 // pred_fallthru
          _
        // Predicated region
        $region25: #{tpu_custom_call.1} parent=15 // pred_check
          %p247 = pneg %p114
        $region26: #{tpu_custom_call.1} parent=15 // pred_check_branch
          %249 = sbr.rel (%p247) target = $region28
        $region27: #{tpu_custom_call.1} parent=15 // pred_region
          %s250 = sand.u32 %s104, 1
          %s251 = scalar_lea.sflag [#allocation7], %s250
          %s252 = sand.u32 %s104, 1
          %s253 = smul.addr %s252, 64
          %s254 = scalar_lea.vmem [#allocation6], %s253
          %s255 = smul.u32 16, %s26
          %s257 = ssub.s32 1024, 1024
          %258 = vsyncadd %s251, %s257
          %s259 = smul.addr %s24, 32
          %s260 = sadd.s32 %s255, %s259
          %s261 = smul.addr %s260, 64
          %s262 = scalar_lea.hbm %s2, %s261
          %s263 = sshll.u32 %s254, 4
          %s264 = int_to_ptr.vmem [resolvable:$true] %s263
          %269 = dma.hbm_to_vmem [thread:$0]  %s262, 1024, %s264, %s251, 64, 64, 4
        $region28: #{tpu_custom_call.1} parent=15 // pred_fallthru
          _
        // Predicated region
        $region29: #{tpu_custom_call.1} parent=15 // pred_check
          %p270 = pneg %p142
        $region30: #{tpu_custom_call.1} parent=15 // pred_check_branch
          %272 = sbr.rel (%p270) target = $region32
        $region31: #{tpu_custom_call.1} parent=15 // pred_region
          %s273 = smul.u32 16, %s25
          %p274 = scmp.lt.s32.totalorder %s24, 3
          %s275 = scalar_select %p274, %s24, 3
          %p276 = scmp.lt.s32.totalorder %s273, 31
          %s277 = scalar_select %p276, %s273, 31
          %s278 = smul.addr %s275, 32
          %s279 = sadd.s32 %s277, %s278
          %s280 = smul.addr %s279, 8
          %s281 = scalar_lea.vmem %s3, %s280
          %s282 = smul.u32 16, %s25
        $region32: #{tpu_custom_call.1} parent=15 // pred_fallthru
          _
        // Predicated region
        $region33: #{tpu_custom_call.1} parent=15 // pred_check
          %p283 = pneg %p168
        $region34: #{tpu_custom_call.1} parent=15 // pred_check_branch
          %285 = sbr.rel (%p283) target = $region36
        $region35: #{tpu_custom_call.1} parent=15 // pred_region
          %p286 = scmp.lt.s32.totalorder %s24, 3
          %s287 = scalar_select %p286, %s24, 3
          %s288 = smul.addr %s287, 2
          %s289 = scalar_lea.vmem %s4, %s288
        $region36: #{tpu_custom_call.1} parent=15 // pred_fallthru
          _
      $region16: #{tpu_custom_call.1} parent=5 // pred_fallthru
        _
      %p290 = scmp.le.s32.totalorder 1, %s17
      %p291 = scmp.lt.s32.totalorder %s17, 17
      %p292 = pnand %p290, %p291
      %p293 = pneg %p292
      // Predicated region
      $region37: #{tpu_custom_call.1} parent=5 // pred_check
        _
      $region38: #{tpu_custom_call.1} parent=5 // pred_check_branch
        %295 = sbr.rel (%p292) target = $region40
      $region39: #{tpu_custom_call.1} parent=5 // pred_region
        %s296 = ssub.s32 %s17, 1
        %s297 = sand.u32 %s107, 1
        %s298 = scalar_lea.sflag [#allocation7], %s297
        %s299 = sand.u32 %s107, 1
        %s300 = smul.addr %s299, 64
        %s301 = scalar_lea.vmem [#allocation6], %s300
        // Predicated region
        $region41: #{tpu_custom_call.1} parent=39 // pred_check
          %p302 = pneg %p120
        $region42: #{tpu_custom_call.1} parent=39 // pred_check_branch
          %304 = sbr.rel (%p302) target = $region44
        $region43: #{tpu_custom_call.1} parent=39 // pred_region
          %305 = dma.done %s298, 1024
        $region44: #{tpu_custom_call.1} parent=39 // pred_fallthru
          _
        %s306 = smul.u32 16, %s28
        %p307 = scmp.lt.s32.totalorder %s27, 3
        %s308 = scalar_select %p307, %s27, 3
        %p309 = scmp.lt.s32.totalorder %s306, 31
        %s310 = scalar_select %p309, %s306, 31
        %s311 = smul.addr %s308, 32
        %s312 = sadd.s32 %s310, %s311
        %s313 = smul.addr %s312, 4
        %s314 = scalar_lea.vmem %s0, %s313
        %p315 = pneg %p64
        %p316 = pneg %p61
        %s317 = smul.u32 16, %s29
        %p318 = scmp.lt.s32.totalorder %s27, 3
        %s319 = scalar_select %p318, %s27, 3
        %p320 = scmp.lt.s32.totalorder %s317, 31
        %s321 = scalar_select %p320, %s317, 31
        %s322 = smul.addr %s319, 32
        %s323 = sadd.s32 %s321, %s322
        %s324 = smul.addr %s323, 4
        %s325 = scalar_lea.vmem %s1, %s324
        %p326 = pneg %p92
        %p327 = pneg %p89
        %s328 = sand.u32 %s107, 1
        %s329 = scalar_lea.sflag [#allocation7], %s328
        %s330 = sand.u32 %s107, 1
        %s331 = smul.addr %s330, 64
        %s332 = scalar_lea.vmem [#allocation6], %s331
        %p333 = pneg %p120
        %p334 = pneg %p117
        %s335 = smul.u32 16, %s28
        %p336 = scmp.lt.s32.totalorder %s27, 3
        %s337 = scalar_select %p336, %s27, 3
        %p338 = scmp.lt.s32.totalorder %s335, 31
        %s339 = scalar_select %p338, %s335, 31
        %s340 = smul.addr %s337, 32
        %s341 = sadd.s32 %s339, %s340
        %s342 = smul.addr %s341, 8
        %s343 = scalar_lea.vmem %s3, %s342
        %p344 = pneg %p148
        %p345 = pneg %p145
        %p346 = scmp.lt.s32.totalorder %s27, 3
        %s347 = scalar_select %p346, %s27, 3
        %s348 = smul.addr %s347, 2
        %s349 = scalar_lea.vmem %s4, %s348
        %p350 = pneg %p174
        %p351 = pneg %p171
        %p352 = pneg %p202
        %p353 = pneg %p199
        %s354 = sand.u32 %s189, 1
        %s355 = scalar_lea.sflag [#allocation8], %s354
        %s356 = sand.u32 %s189, 1
        %s357 = smul.addr %s356, 128
        %s358 = scalar_lea.vmem [#allocation9], %s357
        %s359 = smul.u32 16, %s28
        %p360 = scmp.lt.s32.totalorder %s27, 3
        %s361 = scalar_select %p360, %s27, 3
        %p362 = scmp.lt.s32.totalorder %s359, 31
        %s363 = scalar_select %p362, %s359, 31
        %s364 = smul.addr %s361, 32
        %s365 = sadd.s32 %s363, %s364
        %s366 = smul.addr %s365, 4
        %s367 = scalar_lea.vmem %s0, %s366
        %s368 = smul.u32 16, %s28
        %s369 = smul.u32 16, %s29
        %p370 = scmp.lt.s32.totalorder %s27, 3
        %s371 = scalar_select %p370, %s27, 3
        %p372 = scmp.lt.s32.totalorder %s369, 31
        %s373 = scalar_select %p372, %s369, 31
        %s374 = smul.addr %s371, 32
        %s375 = sadd.s32 %s373, %s374
        %s376 = smul.addr %s375, 4
        %s377 = scalar_lea.vmem %s1, %s376
        %s378 = smul.u32 16, %s29
        %s379 = smul.u32 16, %s29
        %s380 = smul.u32 16, %s28
        %p381 = scmp.lt.s32.totalorder %s27, 3
        %s382 = scalar_select %p381, %s27, 3
        %p383 = scmp.lt.s32.totalorder %s380, 31
        %s384 = scalar_select %p383, %s380, 31
        %s385 = smul.addr %s382, 32
        %s386 = sadd.s32 %s384, %s385
        %s387 = smul.addr %s386, 8
        %s388 = scalar_lea.vmem %s3, %s387
        %s389 = smul.u32 16, %s28
        %p390 = scmp.lt.s32.totalorder %s27, 3
        %s391 = scalar_select %p390, %s27, 3
        %s392 = smul.addr %s391, 2
        %s393 = scalar_lea.vmem %s4, %s392
        %s394 = smul.u32 16, %s28
        %v396 = vld [vmem:[%s388] sm:$0xff]
        %v397 = vld [vmem:[%s388 + $0x8] sm:$0xff]
        %v398 = vld [vmem:[%s388 + $0x10] sm:$0xff]
        %v399 = vld [vmem:[%s388 + $0x18] sm:$0xff]
        %v400 = vld [vmem:[%s388 + $0x20] sm:$0xff]
        %v401 = vld [vmem:[%s388 + $0x28] sm:$0xff]
        %v402 = vld [vmem:[%s388 + $0x30] sm:$0xff]
        %v403 = vld [vmem:[%s388 + $0x38] sm:$0xff]
        %v404 = vld [vmem:[%s388 + $0x40] sm:$0xff]
        %v405 = vld [vmem:[%s388 + $0x48] sm:$0xff]
        %v406 = vld [vmem:[%s388 + $0x50] sm:$0xff]
        %v407 = vld [vmem:[%s388 + $0x58] sm:$0xff]
        %v408 = vld [vmem:[%s388 + $0x60] sm:$0xff]
        %v409 = vld [vmem:[%s388 + $0x68] sm:$0xff]
        %v410 = vld [vmem:[%s388 + $0x70] sm:$0xff]
        %v411 = vld [vmem:[%s388 + $0x78] sm:$0xff]
        %p412 = scmp.eq.s32.totalorder %s29, 0
        // Predicated region
        $region45: #{tpu_custom_call.1} parent=39 // pred_check
          %p413 = pneg %p412
        $region46: #{tpu_custom_call.1} parent=39 // pred_check_branch
          %415 = sbr.rel (%p413) target = $region48
        $region47: #{tpu_custom_call.1} parent=39 // pred_region
          %vm416 = vcmask 7168
          %417 = vst.msk [vmem:[#allocation2] sm:$0xff] %vm416, -inf
          %418 = vst.msk [vmem:[#allocation2 + $0x8] sm:$0xff] %vm416, -inf
          %419 = vst.msk [vmem:[#allocation2 + $0x10] sm:$0xff] %vm416, -inf
          %420 = vst.msk [vmem:[#allocation2 + $0x18] sm:$0xff] %vm416, -inf
          %421 = vst.msk [vmem:[#allocation2 + $0x20] sm:$0xff] %vm416, -inf
          %422 = vst.msk [vmem:[#allocation2 + $0x28] sm:$0xff] %vm416, -inf
          %423 = vst.msk [vmem:[#allocation2 + $0x30] sm:$0xff] %vm416, -inf
          %424 = vst.msk [vmem:[#allocation2 + $0x38] sm:$0xff] %vm416, -inf
          %425 = vst.msk [vmem:[#allocation2 + $0x40] sm:$0xff] %vm416, -inf
          %426 = vst.msk [vmem:[#allocation2 + $0x48] sm:$0xff] %vm416, -inf
          %427 = vst.msk [vmem:[#allocation2 + $0x50] sm:$0xff] %vm416, -inf
          %428 = vst.msk [vmem:[#allocation2 + $0x58] sm:$0xff] %vm416, -inf
          %429 = vst.msk [vmem:[#allocation2 + $0x60] sm:$0xff] %vm416, -inf
          %430 = vst.msk [vmem:[#allocation2 + $0x68] sm:$0xff] %vm416, -inf
          %431 = vst.msk [vmem:[#allocation2 + $0x70] sm:$0xff] %vm416, -inf
          %432 = vst.msk [vmem:[#allocation2 + $0x78] sm:$0xff] %vm416, -inf
          %433 = vst.msk [vmem:[#allocation3] sm:$0xff] %vm416, 0.0
          %434 = vst.msk [vmem:[#allocation3 + $0x8] sm:$0xff] %vm416, 0.0
          %435 = vst.msk [vmem:[#allocation3 + $0x10] sm:$0xff] %vm416, 0.0
          %436 = vst.msk [vmem:[#allocation3 + $0x18] sm:$0xff] %vm416, 0.0
          %437 = vst.msk [vmem:[#allocation3 + $0x20] sm:$0xff] %vm416, 0.0
          %438 = vst.msk [vmem:[#allocation3 + $0x28] sm:$0xff] %vm416, 0.0
          %439 = vst.msk [vmem:[#allocation3 + $0x30] sm:$0xff] %vm416, 0.0
          %440 = vst.msk [vmem:[#allocation3 + $0x38] sm:$0xff] %vm416, 0.0
          %441 = vst.msk [vmem:[#allocation3 + $0x40] sm:$0xff] %vm416, 0.0
          %442 = vst.msk [vmem:[#allocation3 + $0x48] sm:$0xff] %vm416, 0.0
          %443 = vst.msk [vmem:[#allocation3 + $0x50] sm:$0xff] %vm416, 0.0
          %444 = vst.msk [vmem:[#allocation3 + $0x58] sm:$0xff] %vm416, 0.0
          %445 = vst.msk [vmem:[#allocation3 + $0x60] sm:$0xff] %vm416, 0.0
          %446 = vst.msk [vmem:[#allocation3 + $0x68] sm:$0xff] %vm416, 0.0
          %447 = vst.msk [vmem:[#allocation3 + $0x70] sm:$0xff] %vm416, 0.0
          %448 = vst.msk [vmem:[#allocation3 + $0x78] sm:$0xff] %vm416, 0.0
          %449 = vst [vmem:[#allocation4] sm:$0xff] 0.0
          %450 = vst [vmem:[#allocation4 + $0x8] sm:$0xff] 0.0
          %451 = vst [vmem:[#allocation4 + $0x10] sm:$0xff] 0.0
          %452 = vst [vmem:[#allocation4 + $0x18] sm:$0xff] 0.0
          %453 = vst [vmem:[#allocation4 + $0x20] sm:$0xff] 0.0
          %454 = vst [vmem:[#allocation4 + $0x28] sm:$0xff] 0.0
          %455 = vst [vmem:[#allocation4 + $0x30] sm:$0xff] 0.0
          %456 = vst [vmem:[#allocation4 + $0x38] sm:$0xff] 0.0
          %457 = vst [vmem:[#allocation4 + $0x40] sm:$0xff] 0.0
          %458 = vst [vmem:[#allocation4 + $0x48] sm:$0xff] 0.0
          %459 = vst [vmem:[#allocation4 + $0x50] sm:$0xff] 0.0
          %460 = vst [vmem:[#allocation4 + $0x58] sm:$0xff] 0.0
          %461 = vst [vmem:[#allocation4 + $0x60] sm:$0xff] 0.0
          %462 = vst [vmem:[#allocation4 + $0x68] sm:$0xff] 0.0
          %463 = vst [vmem:[#allocation4 + $0x70] sm:$0xff] 0.0
          %464 = vst [vmem:[#allocation4 + $0x78] sm:$0xff] 0.0
          %v465 = vld [vmem:[%s367] sm:$0xf]
          %v466 = vld [vmem:[%s367 + $0x4] sm:$0xf]
          %v467 = vld [vmem:[%s367 + $0x8] sm:$0xf]
          %v468 = vld [vmem:[%s367 + $0xc] sm:$0xf]
          %v469 = vld [vmem:[%s367 + $0x10] sm:$0xf]
          %v470 = vld [vmem:[%s367 + $0x14] sm:$0xf]
          %v471 = vld [vmem:[%s367 + $0x18] sm:$0xf]
          %v472 = vld [vmem:[%s367 + $0x1c] sm:$0xf]
          %v473 = vld [vmem:[%s367 + $0x20] sm:$0xf]
          %v474 = vld [vmem:[%s367 + $0x24] sm:$0xf]
          %v475 = vld [vmem:[%s367 + $0x28] sm:$0xf]
          %v476 = vld [vmem:[%s367 + $0x2c] sm:$0xf]
          %v477 = vld [vmem:[%s367 + $0x30] sm:$0xf]
          %v478 = vld [vmem:[%s367 + $0x34] sm:$0xf]
          %v479 = vld [vmem:[%s367 + $0x38] sm:$0xf]
          %v480 = vld [vmem:[%s367 + $0x3c] sm:$0xf]
          %v481 = vunpack.c.l.bf16 %v465
          %v482 = vunpack.c.l.bf16 %v466
          %v483 = vunpack.c.l.bf16 %v467
          %v484 = vunpack.c.l.bf16 %v468
          %v485 = vunpack.c.l.bf16 %v469
          %v486 = vunpack.c.l.bf16 %v470
          %v487 = vunpack.c.l.bf16 %v471
          %v488 = vunpack.c.l.bf16 %v472
          %v489 = vunpack.c.l.bf16 %v473
          %v490 = vunpack.c.l.bf16 %v474
          %v491 = vunpack.c.l.bf16 %v475
          %v492 = vunpack.c.l.bf16 %v476
          %v493 = vunpack.c.l.bf16 %v477
          %v494 = vunpack.c.l.bf16 %v478
          %v495 = vunpack.c.l.bf16 %v479
          %v496 = vunpack.c.l.bf16 %v480
          %v497 = vmul.f32 %v396, 0.35355338
          %v498 = vmul.f32 %v397, 0.35355338
          %v499 = vmul.f32 %v398, 0.35355338
          %v500 = vmul.f32 %v399, 0.35355338
          %v501 = vmul.f32 %v400, 0.35355338
          %v502 = vmul.f32 %v401, 0.35355338
          %v503 = vmul.f32 %v402, 0.35355338
          %v504 = vmul.f32 %v403, 0.35355338
          %v505 = vmul.f32 %v404, 0.35355338
          %v506 = vmul.f32 %v405, 0.35355338
          %v507 = vmul.f32 %v406, 0.35355338
          %v508 = vmul.f32 %v407, 0.35355338
          %v509 = vmul.f32 %v408, 0.35355338
          %v510 = vmul.f32 %v409, 0.35355338
          %v511 = vmul.f32 %v410, 0.35355338
          %v512 = vmul.f32 %v411, 0.35355338
          %514 = vset.pattern.permute.xlu0 0
          %515 = vperm.xlu0 %514, %v497
          %v516 = vpop.permute.xlu0 %515
          %519 = vset.pattern.permute.xlu0 0
          %520 = vperm.xlu0 %519, %v498
          %v521 = vpop.permute.xlu0 %520
          %524 = vset.pattern.permute.xlu0 0
          %525 = vperm.xlu0 %524, %v499
          %v526 = vpop.permute.xlu0 %525
          %529 = vset.pattern.permute.xlu0 0
          %530 = vperm.xlu0 %529, %v500
          %v531 = vpop.permute.xlu0 %530
          %534 = vset.pattern.permute.xlu0 0
          %535 = vperm.xlu0 %534, %v501
          %v536 = vpop.permute.xlu0 %535
          %539 = vset.pattern.permute.xlu0 0
          %540 = vperm.xlu0 %539, %v502
          %v541 = vpop.permute.xlu0 %540
          %544 = vset.pattern.permute.xlu0 0
          %545 = vperm.xlu0 %544, %v503
          %v546 = vpop.permute.xlu0 %545
          %549 = vset.pattern.permute.xlu0 0
          %550 = vperm.xlu0 %549, %v504
          %v551 = vpop.permute.xlu0 %550
          %554 = vset.pattern.permute.xlu0 0
          %555 = vperm.xlu0 %554, %v505
          %v556 = vpop.permute.xlu0 %555
          %559 = vset.pattern.permute.xlu0 0
          %560 = vperm.xlu0 %559, %v506
          %v561 = vpop.permute.xlu0 %560
          %564 = vset.pattern.permute.xlu0 0
          %565 = vperm.xlu0 %564, %v507
          %v566 = vpop.permute.xlu0 %565
          %569 = vset.pattern.permute.xlu0 0
          %570 = vperm.xlu0 %569, %v508
          %v571 = vpop.permute.xlu0 %570
          %574 = vset.pattern.permute.xlu0 0
          %575 = vperm.xlu0 %574, %v509
          %v576 = vpop.permute.xlu0 %575
          %579 = vset.pattern.permute.xlu0 0
          %580 = vperm.xlu0 %579, %v510
          %v581 = vpop.permute.xlu0 %580
          %584 = vset.pattern.permute.xlu0 0
          %585 = vperm.xlu0 %584, %v511
          %v586 = vpop.permute.xlu0 %585
          %589 = vset.pattern.permute.xlu0 0
          %590 = vperm.xlu0 %589, %v512
          %v591 = vpop.permute.xlu0 %590
          %v593 = vmul.f32 %v481, %v516
          %v594 = vmul.f32 %v482, %v521
          %v595 = vmul.f32 %v483, %v526
          %v596 = vmul.f32 %v484, %v531
          %v597 = vmul.f32 %v485, %v536
          %v598 = vmul.f32 %v486, %v541
          %v599 = vmul.f32 %v487, %v546
          %v600 = vmul.f32 %v488, %v551
          %v601 = vmul.f32 %v489, %v556
          %v602 = vmul.f32 %v490, %v561
          %v603 = vmul.f32 %v491, %v566
          %v604 = vmul.f32 %v492, %v571
          %v605 = vmul.f32 %v493, %v576
          %v606 = vmul.f32 %v494, %v581
          %v607 = vmul.f32 %v495, %v586
          %v608 = vmul.f32 %v496, %v591
          %v609 = vpack.c.bf16 %v594, %v593
          %v610 = vpack.c.bf16 %v596, %v595
          %v611 = vpack.c.bf16 %v598, %v597
          %v612 = vpack.c.bf16 %v600, %v599
          %v613 = vpack.c.bf16 %v602, %v601
          %v614 = vpack.c.bf16 %v604, %v603
          %v615 = vpack.c.bf16 %v606, %v605
          %v616 = vpack.c.bf16 %v608, %v607
          %617 = vst [vmem:[#allocation5] sm:$0xff] %v609
          %618 = vst [vmem:[#allocation5 + $0x8] sm:$0xff] %v610
          %619 = vst [vmem:[#allocation5 + $0x10] sm:$0xff] %v611
          %620 = vst [vmem:[#allocation5 + $0x18] sm:$0xff] %v612
          %621 = vst [vmem:[#allocation5 + $0x20] sm:$0xff] %v613
          %622 = vst [vmem:[#allocation5 + $0x28] sm:$0xff] %v614
          %623 = vst [vmem:[#allocation5 + $0x30] sm:$0xff] %v615
          %624 = vst [vmem:[#allocation5 + $0x38] sm:$0xff] %v616
        $region48: #{tpu_custom_call.1} parent=39 // pred_fallthru
          _
        %v625 = vld [vmem:[#allocation5] sm:$0xff]
        %v626 = vld [vmem:[#allocation5 + $0x8] sm:$0xff]
        %v627 = vld [vmem:[#allocation5 + $0x10] sm:$0xff]
        %v628 = vld [vmem:[#allocation5 + $0x18] sm:$0xff]
        %v629 = vld [vmem:[#allocation5 + $0x20] sm:$0xff]
        %v630 = vld [vmem:[#allocation5 + $0x28] sm:$0xff]
        %v631 = vld [vmem:[#allocation5 + $0x30] sm:$0xff]
        %v632 = vld [vmem:[#allocation5 + $0x38] sm:$0xff]
        %v633 = vld [vmem:[%s377] sm:$0xf]
        %v634 = vld [vmem:[%s377 + $0x4] sm:$0xf]
        %v635 = vld [vmem:[%s377 + $0x8] sm:$0xf]
        %v636 = vld [vmem:[%s377 + $0xc] sm:$0xf]
        %v637 = vld [vmem:[%s377 + $0x10] sm:$0xf]
        %v638 = vld [vmem:[%s377 + $0x14] sm:$0xf]
        %v639 = vld [vmem:[%s377 + $0x18] sm:$0xf]
        %v640 = vld [vmem:[%s377 + $0x1c] sm:$0xf]
        %v641 = vld [vmem:[%s377 + $0x20] sm:$0xf]
        %v642 = vld [vmem:[%s377 + $0x24] sm:$0xf]
        %v643 = vld [vmem:[%s377 + $0x28] sm:$0xf]
        %v644 = vld [vmem:[%s377 + $0x2c] sm:$0xf]
        %v645 = vld [vmem:[%s377 + $0x30] sm:$0xf]
        %v646 = vld [vmem:[%s377 + $0x34] sm:$0xf]
        %v647 = vld [vmem:[%s377 + $0x38] sm:$0xf]
        %v648 = vld [vmem:[%s377 + $0x3c] sm:$0xf]
        %s649 = smul.u32 %s29, 128
        %s650 = sshra.s32 %s649, 7
        %s651 = sand.u32 %s649, 127
        %s652 = scalar_lea.vmem %s393, %s650
        %v653 = vld [vmem:[%s652] sm:$0x1]
        %v655 = vlaneseq
        %v656 = vshrl.u32 %v655, 7
        %v657 = vsub.s32 0, %v656
        %v658 = vrot.slane %v653, %v657
        %v676 = vunpack.c.l.b16 %v633
        %v677 = vunpack.c.l.b16 %v634
        %v678 = vunpack.c.l.b16 %v635
        %v679 = vunpack.c.l.b16 %v636
        %v680 = vunpack.c.l.b16 %v637
        %v681 = vunpack.c.l.b16 %v638
        %v682 = vunpack.c.l.b16 %v639
        %v683 = vunpack.c.l.b16 %v640
        %v684 = vunpack.c.l.b16 %v641
        %v685 = vunpack.c.l.b16 %v642
        %v686 = vunpack.c.l.b16 %v643
        %v687 = vunpack.c.l.b16 %v644
        %v688 = vunpack.c.l.b16 %v645
        %v689 = vunpack.c.l.b16 %v646
        %v690 = vunpack.c.l.b16 %v647
        %v691 = vunpack.c.l.b16 %v648
        %v692 = vpack.c.b16 %v677, %v676
        %v693 = vpack.c.b16 %v679, %v678
        %v694 = vpack.c.b16 %v681, %v680
        %v695 = vpack.c.b16 %v683, %v682
        %v696 = vpack.c.b16 %v685, %v684
        %v697 = vpack.c.b16 %v687, %v686
        %v698 = vpack.c.b16 %v689, %v688
        %v699 = vpack.c.b16 %v691, %v690
        %708 = vmatprep.subr.bf16.mxu0 0
        %709 = vmatpush1.bf16.xpose.msra.mxu0 %v692
        %710 = vmatprep.subr.bf16.mxu0 0
        %711 = vmatpush1.bf16.xpose.msra.mxu0 %v693
        %712 = vmatprep.subr.bf16.mxu0 0
        %713 = vmatpush1.bf16.xpose.msra.mxu0 %v694
        %714 = vmatprep.subr.bf16.mxu0 0
        %715 = vmatpush1.bf16.xpose.msra.mxu0 %v695
        %716 = vmatprep.subr.bf16.mxu0 0
        %717 = vmatpush1.bf16.xpose.msra.mxu0 %v696
        %718 = vmatprep.subr.bf16.mxu0 0
        %719 = vmatpush1.bf16.xpose.msra.mxu0 %v697
        %720 = vmatprep.subr.bf16.mxu0 0
        %721 = vmatpush1.bf16.xpose.msra.mxu0 %v698
        %722 = vmatprep.subr.bf16.mxu0 0
        %723 = vmatpush1.bf16.xpose.msra.mxu0 %v699
        %724 = vmatprep.subr.bf16.mxu0 0
        %725 = vmatpush1.bf16.xpose.msra.mxu0 0
        %726 = vmatprep.subr.bf16.mxu0 0
        %727 = vmatpush1.bf16.xpose.msra.mxu0 0
        %728 = vmatprep.subr.bf16.mxu0 0
        %729 = vmatpush1.bf16.xpose.msra.mxu0 0
        %730 = vmatprep.subr.bf16.mxu0 0
        %731 = vmatpush1.bf16.xpose.msra.mxu0 0
        %732 = vmatprep.subr.bf16.mxu0 0
        %733 = vmatpush1.bf16.xpose.msra.mxu0 0
        %734 = vmatprep.subr.bf16.mxu0 0
        %735 = vmatpush1.bf16.xpose.msra.mxu0 0
        %736 = vmatprep.subr.bf16.mxu0 0
        %737 = vmatpush1.bf16.xpose.msra.mxu0 0
        %738 = vmatprep.subr.bf16.mxu0 0
        %739 = vmatpush1.bf16.xpose.msra.mxu0 0
        %740 = vmatprep.mubr.bf16.mxu0 0
        %741 = vmatmul.mubr.bf16.gmra.mrb[0].mxu0 %v625
        %v742 = vpop.f32.mrb[0].mxu0
        %v743 = vadd.f32 %v658, %v742
        %v744 = vpop.f32.mrb[0].mxu0
        %v745 = vpop.f32.mrb[0].mxu0
        %v746 = vadd.f32 %v658, %v745
        %v747 = vpop.f32.mrb[0].mxu0
        %748 = vmatprep.mubr.bf16.mxu0 0
        %749 = vmatmul.mubr.bf16.gmra.mrb[0].mxu0 %v626
        %v750 = vpop.f32.mrb[0].mxu0
        %v751 = vadd.f32 %v658, %v750
        %v752 = vpop.f32.mrb[0].mxu0
        %v753 = vpop.f32.mrb[0].mxu0
        %v754 = vadd.f32 %v658, %v753
        %v755 = vpop.f32.mrb[0].mxu0
        %756 = vmatprep.mubr.bf16.mxu0 0
        %757 = vmatmul.mubr.bf16.gmra.mrb[0].mxu0 %v627
        %v758 = vpop.f32.mrb[0].mxu0
        %v759 = vadd.f32 %v658, %v758
        %v760 = vpop.f32.mrb[0].mxu0
        %v761 = vpop.f32.mrb[0].mxu0
        %v762 = vadd.f32 %v658, %v761
        %v763 = vpop.f32.mrb[0].mxu0
        %764 = vmatprep.mubr.bf16.mxu0 0
        %765 = vmatmul.mubr.bf16.gmra.mrb[0].mxu0 %v628
        %v766 = vpop.f32.mrb[0].mxu0
        %v767 = vadd.f32 %v658, %v766
        %v768 = vpop.f32.mrb[0].mxu0
        %v769 = vpop.f32.mrb[0].mxu0
        %v770 = vadd.f32 %v658, %v769
        %v771 = vpop.f32.mrb[0].mxu0
        %772 = vmatprep.mubr.bf16.mxu0 0
        %773 = vmatmul.mubr.bf16.gmra.mrb[0].mxu0 %v629
        %v774 = vpop.f32.mrb[0].mxu0
        %v775 = vadd.f32 %v658, %v774
        %v776 = vpop.f32.mrb[0].mxu0
        %v777 = vpop.f32.mrb[0].mxu0
        %v778 = vadd.f32 %v658, %v777
        %v779 = vpop.f32.mrb[0].mxu0
        %780 = vmatprep.mubr.bf16.mxu0 0
        %781 = vmatmul.mubr.bf16.gmra.mrb[0].mxu0 %v630
        %v782 = vpop.f32.mrb[0].mxu0
        %v783 = vadd.f32 %v658, %v782
        %v784 = vpop.f32.mrb[0].mxu0
        %v785 = vpop.f32.mrb[0].mxu0
        %v786 = vadd.f32 %v658, %v785
        %v787 = vpop.f32.mrb[0].mxu0
        %788 = vmatprep.mubr.bf16.mxu0 0
        %789 = vmatmul.mubr.bf16.gmra.mrb[0].mxu0 %v631
        %v790 = vpop.f32.mrb[0].mxu0
        %v791 = vadd.f32 %v658, %v790
        %v792 = vpop.f32.mrb[0].mxu0
        %v793 = vpop.f32.mrb[0].mxu0
        %v794 = vadd.f32 %v658, %v793
        %v795 = vpop.f32.mrb[0].mxu0
        %796 = vmatprep.mubr.bf16.mxu0 0
        %797 = vmatmul.mubr.bf16.gmra.mrb[0].mxu0 %v632
        %v798 = vpop.f32.mrb[0].mxu0
        %v799 = vadd.f32 %v658, %v798
        %v800 = vpop.f32.mrb[0].mxu0
        %v801 = vpop.f32.mrb[0].mxu0
        %v802 = vadd.f32 %v658, %v801
        %v803 = vpop.f32.mrb[0].mxu0
        %804 = vdwg.mxu0
        %v805 = vld [vmem:[#allocation2] sm:$0xff]
        %v806 = vld [vmem:[#allocation2 + $0x8] sm:$0xff]
        %v807 = vld [vmem:[#allocation2 + $0x10] sm:$0xff]
        %v808 = vld [vmem:[#allocation2 + $0x18] sm:$0xff]
        %v809 = vld [vmem:[#allocation2 + $0x20] sm:$0xff]
        %v810 = vld [vmem:[#allocation2 + $0x28] sm:$0xff]
        %v811 = vld [vmem:[#allocation2 + $0x30] sm:$0xff]
        %v812 = vld [vmem:[#allocation2 + $0x38] sm:$0xff]
        %v813 = vld [vmem:[#allocation2 + $0x40] sm:$0xff]
        %v814 = vld [vmem:[#allocation2 + $0x48] sm:$0xff]
        %v815 = vld [vmem:[#allocation2 + $0x50] sm:$0xff]
        %v816 = vld [vmem:[#allocation2 + $0x58] sm:$0xff]
        %v817 = vld [vmem:[#allocation2 + $0x60] sm:$0xff]
        %v818 = vld [vmem:[#allocation2 + $0x68] sm:$0xff]
        %v819 = vld [vmem:[#allocation2 + $0x70] sm:$0xff]
        %v820 = vld [vmem:[#allocation2 + $0x78] sm:$0xff]
        %821 = vmax.xlane.f32.xlu0 %v743
        %v822 = vpop.xlane.xlu0 %821
        %823 = vmax.xlane.f32.xlu0 %v746
        %v824 = vpop.xlane.xlu0 %823
        %825 = vmax.xlane.f32.xlu0 %v751
        %v826 = vpop.xlane.xlu0 %825
        %827 = vmax.xlane.f32.xlu0 %v754
        %v828 = vpop.xlane.xlu0 %827
        %829 = vmax.xlane.f32.xlu0 %v759
        %v830 = vpop.xlane.xlu0 %829
        %831 = vmax.xlane.f32.xlu0 %v762
        %v832 = vpop.xlane.xlu0 %831
        %833 = vmax.xlane.f32.xlu0 %v767
        %v834 = vpop.xlane.xlu0 %833
        %835 = vmax.xlane.f32.xlu0 %v770
        %v836 = vpop.xlane.xlu0 %835
        %837 = vmax.xlane.f32.xlu0 %v775
        %v838 = vpop.xlane.xlu0 %837
        %839 = vmax.xlane.f32.xlu0 %v778
        %v840 = vpop.xlane.xlu0 %839
        %841 = vmax.xlane.f32.xlu0 %v783
        %v842 = vpop.xlane.xlu0 %841
        %843 = vmax.xlane.f32.xlu0 %v786
        %v844 = vpop.xlane.xlu0 %843
        %845 = vmax.xlane.f32.xlu0 %v791
        %v846 = vpop.xlane.xlu0 %845
        %847 = vmax.xlane.f32.xlu0 %v794
        %v848 = vpop.xlane.xlu0 %847
        %849 = vmax.xlane.f32.xlu0 %v799
        %v850 = vpop.xlane.xlu0 %849
        %851 = vmax.xlane.f32.xlu0 %v802
        %v852 = vpop.xlane.xlu0 %851
        %v853 = vmax.f32 %v805, %v822
        %v854 = vmax.f32 %v806, %v824
        %v855 = vmax.f32 %v807, %v826
        %v856 = vmax.f32 %v808, %v828
        %v857 = vmax.f32 %v809, %v830
        %v858 = vmax.f32 %v810, %v832
        %v859 = vmax.f32 %v811, %v834
        %v860 = vmax.f32 %v812, %v836
        %v861 = vmax.f32 %v813, %v838
        %v862 = vmax.f32 %v814, %v840
        %v863 = vmax.f32 %v815, %v842
        %v864 = vmax.f32 %v816, %v844
        %v865 = vmax.f32 %v817, %v846
        %v866 = vmax.f32 %v818, %v848
        %v867 = vmax.f32 %v819, %v850
        %v868 = vmax.f32 %v820, %v852
        %v869 = vsub.f32 %v805, %v853
        %v870 = vsub.f32 %v806, %v854
        %v871 = vsub.f32 %v807, %v855
        %v872 = vsub.f32 %v808, %v856
        %v873 = vsub.f32 %v809, %v857
        %v874 = vsub.f32 %v810, %v858
        %v875 = vsub.f32 %v811, %v859
        %v876 = vsub.f32 %v812, %v860
        %v877 = vsub.f32 %v813, %v861
        %v878 = vsub.f32 %v814, %v862
        %v879 = vsub.f32 %v815, %v863
        %v880 = vsub.f32 %v816, %v864
        %v881 = vsub.f32 %v817, %v865
        %v882 = vsub.f32 %v818, %v866
        %v883 = vsub.f32 %v819, %v867
        %v884 = vsub.f32 %v820, %v868
        %v885 = vmul.f32 %v869, 1.442695
        %v886 = vpow.pop %v885
        %v887 = vmul.f32 %v870, 1.442695
        %v888 = vpow.pop %v887
        %v889 = vmul.f32 %v871, 1.442695
        %v890 = vpow.pop %v889
        %v891 = vmul.f32 %v872, 1.442695
        %v892 = vpow.pop %v891
        %v893 = vmul.f32 %v873, 1.442695
        %v894 = vpow.pop %v893
        %v895 = vmul.f32 %v874, 1.442695
        %v896 = vpow.pop %v895
        %v897 = vmul.f32 %v875, 1.442695
        %v898 = vpow.pop %v897
        %v899 = vmul.f32 %v876, 1.442695
        %v900 = vpow.pop %v899
        %v901 = vmul.f32 %v877, 1.442695
        %v902 = vpow.pop %v901
        %v903 = vmul.f32 %v878, 1.442695
        %v904 = vpow.pop %v903
        %v905 = vmul.f32 %v879, 1.442695
        %v906 = vpow.pop %v905
        %v907 = vmul.f32 %v880, 1.442695
        %v908 = vpow.pop %v907
        %v909 = vmul.f32 %v881, 1.442695
        %v910 = vpow.pop %v909
        %v911 = vmul.f32 %v882, 1.442695
        %v912 = vpow.pop %v911
        %v913 = vmul.f32 %v883, 1.442695
        %v914 = vpow.pop %v913
        %v915 = vmul.f32 %v884, 1.442695
        %v916 = vpow.pop %v915
        %918 = vset.pattern.permute.xlu0 0
        %919 = vperm.xlu0 %918, %v853
        %v920 = vpop.permute.xlu0 %919
        %923 = vset.pattern.permute.xlu0 0
        %924 = vperm.xlu0 %923, %v854
        %v925 = vpop.permute.xlu0 %924
        %928 = vset.pattern.permute.xlu0 0
        %929 = vperm.xlu0 %928, %v855
        %v930 = vpop.permute.xlu0 %929
        %933 = vset.pattern.permute.xlu0 0
        %934 = vperm.xlu0 %933, %v856
        %v935 = vpop.permute.xlu0 %934
        %938 = vset.pattern.permute.xlu0 0
        %939 = vperm.xlu0 %938, %v857
        %v940 = vpop.permute.xlu0 %939
        %943 = vset.pattern.permute.xlu0 0
        %944 = vperm.xlu0 %943, %v858
        %v945 = vpop.permute.xlu0 %944
        %948 = vset.pattern.permute.xlu0 0
        %949 = vperm.xlu0 %948, %v859
        %v950 = vpop.permute.xlu0 %949
        %953 = vset.pattern.permute.xlu0 0
        %954 = vperm.xlu0 %953, %v860
        %v955 = vpop.permute.xlu0 %954
        %958 = vset.pattern.permute.xlu0 0
        %959 = vperm.xlu0 %958, %v861
        %v960 = vpop.permute.xlu0 %959
        %963 = vset.pattern.permute.xlu0 0
        %964 = vperm.xlu0 %963, %v862
        %v965 = vpop.permute.xlu0 %964
        %968 = vset.pattern.permute.xlu0 0
        %969 = vperm.xlu0 %968, %v863
        %v970 = vpop.permute.xlu0 %969
        %973 = vset.pattern.permute.xlu0 0
        %974 = vperm.xlu0 %973, %v864
        %v975 = vpop.permute.xlu0 %974
        %978 = vset.pattern.permute.xlu0 0
        %979 = vperm.xlu0 %978, %v865
        %v980 = vpop.permute.xlu0 %979
        %983 = vset.pattern.permute.xlu0 0
        %984 = vperm.xlu0 %983, %v866
        %v985 = vpop.permute.xlu0 %984
        %988 = vset.pattern.permute.xlu0 0
        %989 = vperm.xlu0 %988, %v867
        %v990 = vpop.permute.xlu0 %989
        %993 = vset.pattern.permute.xlu0 0
        %994 = vperm.xlu0 %993, %v868
        %v995 = vpop.permute.xlu0 %994
        %v997 = vsub.f32 %v743, %v920
        %v998 = vsub.f32 %v746, %v925
        %v999 = vsub.f32 %v751, %v930
        %v1000 = vsub.f32 %v754, %v935
        %v1001 = vsub.f32 %v759, %v940
        %v1002 = vsub.f32 %v762, %v945
        %v1003 = vsub.f32 %v767, %v950
        %v1004 = vsub.f32 %v770, %v955
        %v1005 = vsub.f32 %v775, %v960
        %v1006 = vsub.f32 %v778, %v965
        %v1007 = vsub.f32 %v783, %v970
        %v1008 = vsub.f32 %v786, %v975
        %v1009 = vsub.f32 %v791, %v980
        %v1010 = vsub.f32 %v794, %v985
        %v1011 = vsub.f32 %v799, %v990
        %v1012 = vsub.f32 %v802, %v995
        %v1013 = vpack.c.bf16 %v998, %v997
        %v1014 = vpack.c.bf16 %v1000, %v999
        %v1015 = vpack.c.bf16 %v1002, %v1001
        %v1016 = vpack.c.bf16 %v1004, %v1003
        %v1017 = vpack.c.bf16 %v1006, %v1005
        %v1018 = vpack.c.bf16 %v1008, %v1007
        %v1019 = vpack.c.bf16 %v1010, %v1009
        %v1020 = vpack.c.bf16 %v1012, %v1011
        %v1022 = vmul.bf16 %v1013, 1069105081
        %v1023 = vpow.bf16.pop %v1022
        %v1025 = vmul.bf16 %v1014, 1069105081
        %v1026 = vpow.bf16.pop %v1025
        %v1028 = vmul.bf16 %v1015, 1069105081
        %v1029 = vpow.bf16.pop %v1028
        %v1031 = vmul.bf16 %v1016, 1069105081
        %v1032 = vpow.bf16.pop %v1031
        %v1034 = vmul.bf16 %v1017, 1069105081
        %v1035 = vpow.bf16.pop %v1034
        %v1037 = vmul.bf16 %v1018, 1069105081
        %v1038 = vpow.bf16.pop %v1037
        %v1040 = vmul.bf16 %v1019, 1069105081
        %v1041 = vpow.bf16.pop %v1040
        %v1043 = vmul.bf16 %v1020, 1069105081
        %v1044 = vpow.bf16.pop %v1043
        %v1045 = vunpack.c.l.bf16 %v1023
        %v1046 = vunpack.c.h.bf16 %v1023
        %v1047 = vunpack.c.l.bf16 %v1026
        %v1048 = vunpack.c.h.bf16 %v1026
        %v1049 = vunpack.c.l.bf16 %v1029
        %v1050 = vunpack.c.h.bf16 %v1029
        %v1051 = vunpack.c.l.bf16 %v1032
        %v1052 = vunpack.c.h.bf16 %v1032
        %v1053 = vunpack.c.l.bf16 %v1035
        %v1054 = vunpack.c.h.bf16 %v1035
        %v1055 = vunpack.c.l.bf16 %v1038
        %v1056 = vunpack.c.h.bf16 %v1038
        %v1057 = vunpack.c.l.bf16 %v1041
        %v1058 = vunpack.c.h.bf16 %v1041
        %v1059 = vunpack.c.l.bf16 %v1044
        %v1060 = vunpack.c.h.bf16 %v1044
        %1061 = vadd.xlane.f32.xlu0 %v1045
        %v1062 = vpop.xlane.xlu0 %1061
        %1063 = vadd.xlane.f32.xlu0 %v1046
        %v1064 = vpop.xlane.xlu0 %1063
        %1065 = vadd.xlane.f32.xlu0 %v1047
        %v1066 = vpop.xlane.xlu0 %1065
        %1067 = vadd.xlane.f32.xlu0 %v1048
        %v1068 = vpop.xlane.xlu0 %1067
        %1069 = vadd.xlane.f32.xlu0 %v1049
        %v1070 = vpop.xlane.xlu0 %1069
        %1071 = vadd.xlane.f32.xlu0 %v1050
        %v1072 = vpop.xlane.xlu0 %1071
        %1073 = vadd.xlane.f32.xlu0 %v1051
        %v1074 = vpop.xlane.xlu0 %1073
        %1075 = vadd.xlane.f32.xlu0 %v1052
        %v1076 = vpop.xlane.xlu0 %1075
        %1077 = vadd.xlane.f32.xlu0 %v1053
        %v1078 = vpop.xlane.xlu0 %1077
        %1079 = vadd.xlane.f32.xlu0 %v1054
        %v1080 = vpop.xlane.xlu0 %1079
        %1081 = vadd.xlane.f32.xlu0 %v1055
        %v1082 = vpop.xlane.xlu0 %1081
        %1083 = vadd.xlane.f32.xlu0 %v1056
        %v1084 = vpop.xlane.xlu0 %1083
        %1085 = vadd.xlane.f32.xlu0 %v1057
        %v1086 = vpop.xlane.xlu0 %1085
        %1087 = vadd.xlane.f32.xlu0 %v1058
        %v1088 = vpop.xlane.xlu0 %1087
        %1089 = vadd.xlane.f32.xlu0 %v1059
        %v1090 = vpop.xlane.xlu0 %1089
        %1091 = vadd.xlane.f32.xlu0 %v1060
        %v1092 = vpop.xlane.xlu0 %1091
        %v1093 = vld [vmem:[%s301] sm:$0xf]
        %v1094 = vld [vmem:[%s301 + $0x4] sm:$0xf]
        %v1095 = vld [vmem:[%s301 + $0x8] sm:$0xf]
        %v1096 = vld [vmem:[%s301 + $0xc] sm:$0xf]
        %v1097 = vld [vmem:[%s301 + $0x10] sm:$0xf]
        %v1098 = vld [vmem:[%s301 + $0x14] sm:$0xf]
        %v1099 = vld [vmem:[%s301 + $0x18] sm:$0xf]
        %v1100 = vld [vmem:[%s301 + $0x1c] sm:$0xf]
        %v1101 = vld [vmem:[%s301 + $0x20] sm:$0xf]
        %v1102 = vld [vmem:[%s301 + $0x24] sm:$0xf]
        %v1103 = vld [vmem:[%s301 + $0x28] sm:$0xf]
        %v1104 = vld [vmem:[%s301 + $0x2c] sm:$0xf]
        %v1105 = vld [vmem:[%s301 + $0x30] sm:$0xf]
        %v1106 = vld [vmem:[%s301 + $0x34] sm:$0xf]
        %v1107 = vld [vmem:[%s301 + $0x38] sm:$0xf]
        %v1108 = vld [vmem:[%s301 + $0x3c] sm:$0xf]
        %v1125 = vunpack.c.l.b16 %v1093
        %v1126 = vunpack.c.l.b16 %v1094
        %v1127 = vunpack.c.l.b16 %v1095
        %v1128 = vunpack.c.l.b16 %v1096
        %v1129 = vunpack.c.l.b16 %v1097
        %v1130 = vunpack.c.l.b16 %v1098
        %v1131 = vunpack.c.l.b16 %v1099
        %v1132 = vunpack.c.l.b16 %v1100
        %v1133 = vunpack.c.l.b16 %v1101
        %v1134 = vunpack.c.l.b16 %v1102
        %v1135 = vunpack.c.l.b16 %v1103
        %v1136 = vunpack.c.l.b16 %v1104
        %v1137 = vunpack.c.l.b16 %v1105
        %v1138 = vunpack.c.l.b16 %v1106
        %v1139 = vunpack.c.l.b16 %v1107
        %v1140 = vunpack.c.l.b16 %v1108
        %v1141 = vpack.c.b16 %v1126, %v1125
        %v1142 = vpack.c.b16 %v1128, %v1127
        %v1143 = vpack.c.b16 %v1130, %v1129
        %v1144 = vpack.c.b16 %v1132, %v1131
        %v1145 = vpack.c.b16 %v1134, %v1133
        %v1146 = vpack.c.b16 %v1136, %v1135
        %v1147 = vpack.c.b16 %v1138, %v1137
        %v1148 = vpack.c.b16 %v1140, %v1139
        %1157 = vmatprep.subr.bf16.mxu0 0
        %1158 = vmatpush1.bf16.msra.mxu0 %v1141
        %1159 = vmatprep.subr.bf16.mxu0 0
        %1160 = vmatpush1.bf16.msra.mxu0 %v1142
        %1161 = vmatprep.subr.bf16.mxu0 0
        %1162 = vmatpush1.bf16.msra.mxu0 %v1143
        %1163 = vmatprep.subr.bf16.mxu0 0
        %1164 = vmatpush1.bf16.msra.mxu0 %v1144
        %1165 = vmatprep.subr.bf16.mxu0 0
        %1166 = vmatpush1.bf16.msra.mxu0 %v1145
        %1167 = vmatprep.subr.bf16.mxu0 0
        %1168 = vmatpush1.bf16.msra.mxu0 %v1146
        %1169 = vmatprep.subr.bf16.mxu0 0
        %1170 = vmatpush1.bf16.msra.mxu0 %v1147
        %1171 = vmatprep.subr.bf16.mxu0 0
        %1172 = vmatpush1.bf16.msra.mxu0 %v1148
        %1173 = vmatprep.subr.bf16.mxu0 0
        %1174 = vmatpush1.bf16.msra.mxu0 0
        %1175 = vmatprep.subr.bf16.mxu0 0
        %1176 = vmatpush1.bf16.msra.mxu0 0
        %1177 = vmatprep.subr.bf16.mxu0 0
        %1178 = vmatpush1.bf16.msra.mxu0 0
        %1179 = vmatprep.subr.bf16.mxu0 0
        %1180 = vmatpush1.bf16.msra.mxu0 0
        %1181 = vmatprep.subr.bf16.mxu0 0
        %1182 = vmatpush1.bf16.msra.mxu0 0
        %1183 = vmatprep.subr.bf16.mxu0 0
        %1184 = vmatpush1.bf16.msra.mxu0 0
        %1185 = vmatprep.subr.bf16.mxu0 0
        %1186 = vmatpush1.bf16.msra.mxu0 0
        %1187 = vmatprep.subr.bf16.mxu0 0
        %1188 = vmatpush1.bf16.msra.mxu0 0
        %1189 = vmatprep.mubr.bf16.mxu0 0
        %1190 = vmatmul.mubr.bf16.gmra.mrb[0].mxu0 %v1023
        %v1191 = vpop.f32.mrb[0].mxu0
        %v1192 = vadd.f32 0.0, %v1191
        %v1193 = vpop.f32.mrb[0].mxu0
        %v1194 = vpop.f32.mrb[0].mxu0
        %v1195 = vadd.f32 0.0, %v1194
        %v1196 = vpop.f32.mrb[0].mxu0
        %1197 = vmatprep.mubr.bf16.mxu0 0
        %1198 = vmatmul.mubr.bf16.gmra.mrb[0].mxu0 %v1026
        %v1199 = vpop.f32.mrb[0].mxu0
        %v1200 = vadd.f32 0.0, %v1199
        %v1201 = vpop.f32.mrb[0].mxu0
        %v1202 = vpop.f32.mrb[0].mxu0
        %v1203 = vadd.f32 0.0, %v1202
        %v1204 = vpop.f32.mrb[0].mxu0
        %1205 = vmatprep.mubr.bf16.mxu0 0
        %1206 = vmatmul.mubr.bf16.gmra.mrb[0].mxu0 %v1029
        %v1207 = vpop.f32.mrb[0].mxu0
        %v1208 = vadd.f32 0.0, %v1207
        %v1209 = vpop.f32.mrb[0].mxu0
        %v1210 = vpop.f32.mrb[0].mxu0
        %v1211 = vadd.f32 0.0, %v1210
        %v1212 = vpop.f32.mrb[0].mxu0
        %1213 = vmatprep.mubr.bf16.mxu0 0
        %1214 = vmatmul.mubr.bf16.gmra.mrb[0].mxu0 %v1032
        %v1215 = vpop.f32.mrb[0].mxu0
        %v1216 = vadd.f32 0.0, %v1215
        %v1217 = vpop.f32.mrb[0].mxu0
        %v1218 = vpop.f32.mrb[0].mxu0
        %v1219 = vadd.f32 0.0, %v1218
        %v1220 = vpop.f32.mrb[0].mxu0
        %1221 = vmatprep.mubr.bf16.mxu0 0
        %1222 = vmatmul.mubr.bf16.gmra.mrb[0].mxu0 %v1035
        %v1223 = vpop.f32.mrb[0].mxu0
        %v1224 = vadd.f32 0.0, %v1223
        %v1225 = vpop.f32.mrb[0].mxu0
        %v1226 = vpop.f32.mrb[0].mxu0
        %v1227 = vadd.f32 0.0, %v1226
        %v1228 = vpop.f32.mrb[0].mxu0
        %1229 = vmatprep.mubr.bf16.mxu0 0
        %1230 = vmatmul.mubr.bf16.gmra.mrb[0].mxu0 %v1038
        %v1231 = vpop.f32.mrb[0].mxu0
        %v1232 = vadd.f32 0.0, %v1231
        %v1233 = vpop.f32.mrb[0].mxu0
        %v1234 = vpop.f32.mrb[0].mxu0
        %v1235 = vadd.f32 0.0, %v1234
        %v1236 = vpop.f32.mrb[0].mxu0
        %1237 = vmatprep.mubr.bf16.mxu0 0
        %1238 = vmatmul.mubr.bf16.gmra.mrb[0].mxu0 %v1041
        %v1239 = vpop.f32.mrb[0].mxu0
        %v1240 = vadd.f32 0.0, %v1239
        %v1241 = vpop.f32.mrb[0].mxu0
        %v1242 = vpop.f32.mrb[0].mxu0
        %v1243 = vadd.f32 0.0, %v1242
        %v1244 = vpop.f32.mrb[0].mxu0
        %1245 = vmatprep.mubr.bf16.mxu0 0
        %1246 = vmatmul.mubr.bf16.gmra.mrb[0].mxu0 %v1044
        %v1247 = vpop.f32.mrb[0].mxu0
        %v1248 = vadd.f32 0.0, %v1247
        %v1249 = vpop.f32.mrb[0].mxu0
        %v1250 = vpop.f32.mrb[0].mxu0
        %v1251 = vadd.f32 0.0, %v1250
        %v1252 = vpop.f32.mrb[0].mxu0
        %1253 = vdwg.mxu0
        %v1254 = vld [vmem:[#allocation3] sm:$0xff]
        %v1255 = vld [vmem:[#allocation3 + $0x8] sm:$0xff]
        %v1256 = vld [vmem:[#allocation3 + $0x10] sm:$0xff]
        %v1257 = vld [vmem:[#allocation3 + $0x18] sm:$0xff]
        %v1258 = vld [vmem:[#allocation3 + $0x20] sm:$0xff]
        %v1259 = vld [vmem:[#allocation3 + $0x28] sm:$0xff]
        %v1260 = vld [vmem:[#allocation3 + $0x30] sm:$0xff]
        %v1261 = vld [vmem:[#allocation3 + $0x38] sm:$0xff]
        %v1262 = vld [vmem:[#allocation3 + $0x40] sm:$0xff]
        %v1263 = vld [vmem:[#allocation3 + $0x48] sm:$0xff]
        %v1264 = vld [vmem:[#allocation3 + $0x50] sm:$0xff]
        %v1265 = vld [vmem:[#allocation3 + $0x58] sm:$0xff]
        %v1266 = vld [vmem:[#allocation3 + $0x60] sm:$0xff]
        %v1267 = vld [vmem:[#allocation3 + $0x68] sm:$0xff]
        %v1268 = vld [vmem:[#allocation3 + $0x70] sm:$0xff]
        %v1269 = vld [vmem:[#allocation3 + $0x78] sm:$0xff]
        %v1270 = vmul.f32 %v886, %v1254
        %v1271 = vmul.f32 %v888, %v1255
        %v1272 = vmul.f32 %v890, %v1256
        %v1273 = vmul.f32 %v892, %v1257
        %v1274 = vmul.f32 %v894, %v1258
        %v1275 = vmul.f32 %v896, %v1259
        %v1276 = vmul.f32 %v898, %v1260
        %v1277 = vmul.f32 %v900, %v1261
        %v1278 = vmul.f32 %v902, %v1262
        %v1279 = vmul.f32 %v904, %v1263
        %v1280 = vmul.f32 %v906, %v1264
        %v1281 = vmul.f32 %v908, %v1265
        %v1282 = vmul.f32 %v910, %v1266
        %v1283 = vmul.f32 %v912, %v1267
        %v1284 = vmul.f32 %v914, %v1268
        %v1285 = vmul.f32 %v916, %v1269
        %v1286 = vadd.f32 %v1270, %v1062
        %v1287 = vadd.f32 %v1271, %v1064
        %v1288 = vadd.f32 %v1272, %v1066
        %v1289 = vadd.f32 %v1273, %v1068
        %v1290 = vadd.f32 %v1274, %v1070
        %v1291 = vadd.f32 %v1275, %v1072
        %v1292 = vadd.f32 %v1276, %v1074
        %v1293 = vadd.f32 %v1277, %v1076
        %v1294 = vadd.f32 %v1278, %v1078
        %v1295 = vadd.f32 %v1279, %v1080
        %v1296 = vadd.f32 %v1280, %v1082
        %v1297 = vadd.f32 %v1281, %v1084
        %v1298 = vadd.f32 %v1282, %v1086
        %v1299 = vadd.f32 %v1283, %v1088
        %v1300 = vadd.f32 %v1284, %v1090
        %v1301 = vadd.f32 %v1285, %v1092
        %vm1302 = vcmask 7168
        %1303 = vst.msk [vmem:[#allocation3] sm:$0xff] %vm1302, %v1286
        %1304 = vst.msk [vmem:[#allocation3 + $0x8] sm:$0xff] %vm1302, %v1287
        %1305 = vst.msk [vmem:[#allocation3 + $0x10] sm:$0xff] %vm1302, %v1288
        %1306 = vst.msk [vmem:[#allocation3 + $0x18] sm:$0xff] %vm1302, %v1289
        %1307 = vst.msk [vmem:[#allocation3 + $0x20] sm:$0xff] %vm1302, %v1290
        %1308 = vst.msk [vmem:[#allocation3 + $0x28] sm:$0xff] %vm1302, %v1291
        %1309 = vst.msk [vmem:[#allocation3 + $0x30] sm:$0xff] %vm1302, %v1292
        %1310 = vst.msk [vmem:[#allocation3 + $0x38] sm:$0xff] %vm1302, %v1293
        %1311 = vst.msk [vmem:[#allocation3 + $0x40] sm:$0xff] %vm1302, %v1294
        %1312 = vst.msk [vmem:[#allocation3 + $0x48] sm:$0xff] %vm1302, %v1295
        %1313 = vst.msk [vmem:[#allocation3 + $0x50] sm:$0xff] %vm1302, %v1296
        %1314 = vst.msk [vmem:[#allocation3 + $0x58] sm:$0xff] %vm1302, %v1297
        %1315 = vst.msk [vmem:[#allocation3 + $0x60] sm:$0xff] %vm1302, %v1298
        %1316 = vst.msk [vmem:[#allocation3 + $0x68] sm:$0xff] %vm1302, %v1299
        %1317 = vst.msk [vmem:[#allocation3 + $0x70] sm:$0xff] %vm1302, %v1300
        %1318 = vst.msk [vmem:[#allocation3 + $0x78] sm:$0xff] %vm1302, %v1301
        %v1319 = vld [vmem:[#allocation4] sm:$0xff]
        %v1320 = vld [vmem:[#allocation4 + $0x8] sm:$0xff]
        %v1321 = vld [vmem:[#allocation4 + $0x10] sm:$0xff]
        %v1322 = vld [vmem:[#allocation4 + $0x18] sm:$0xff]
        %v1323 = vld [vmem:[#allocation4 + $0x20] sm:$0xff]
        %v1324 = vld [vmem:[#allocation4 + $0x28] sm:$0xff]
        %v1325 = vld [vmem:[#allocation4 + $0x30] sm:$0xff]
        %v1326 = vld [vmem:[#allocation4 + $0x38] sm:$0xff]
        %v1327 = vld [vmem:[#allocation4 + $0x40] sm:$0xff]
        %v1328 = vld [vmem:[#allocation4 + $0x48] sm:$0xff]
        %v1329 = vld [vmem:[#allocation4 + $0x50] sm:$0xff]
        %v1330 = vld [vmem:[#allocation4 + $0x58] sm:$0xff]
        %v1331 = vld [vmem:[#allocation4 + $0x60] sm:$0xff]
        %v1332 = vld [vmem:[#allocation4 + $0x68] sm:$0xff]
        %v1333 = vld [vmem:[#allocation4 + $0x70] sm:$0xff]
        %v1334 = vld [vmem:[#allocation4 + $0x78] sm:$0xff]
        %1336 = vset.pattern.permute.xlu0 0
        %1337 = vperm.xlu0 %1336, %v886
        %v1338 = vpop.permute.xlu0 %1337
        %1341 = vset.pattern.permute.xlu0 0
        %1342 = vperm.xlu0 %1341, %v888
        %v1343 = vpop.permute.xlu0 %1342
        %1346 = vset.pattern.permute.xlu0 0
        %1347 = vperm.xlu0 %1346, %v890
        %v1348 = vpop.permute.xlu0 %1347
        %1351 = vset.pattern.permute.xlu0 0
        %1352 = vperm.xlu0 %1351, %v892
        %v1353 = vpop.permute.xlu0 %1352
        %1356 = vset.pattern.permute.xlu0 0
        %1357 = vperm.xlu0 %1356, %v894
        %v1358 = vpop.permute.xlu0 %1357
        %1361 = vset.pattern.permute.xlu0 0
        %1362 = vperm.xlu0 %1361, %v896
        %v1363 = vpop.permute.xlu0 %1362
        %1366 = vset.pattern.permute.xlu0 0
        %1367 = vperm.xlu0 %1366, %v898
        %v1368 = vpop.permute.xlu0 %1367
        %1371 = vset.pattern.permute.xlu0 0
        %1372 = vperm.xlu0 %1371, %v900
        %v1373 = vpop.permute.xlu0 %1372
        %1376 = vset.pattern.permute.xlu0 0
        %1377 = vperm.xlu0 %1376, %v902
        %v1378 = vpop.permute.xlu0 %1377
        %1381 = vset.pattern.permute.xlu0 0
        %1382 = vperm.xlu0 %1381, %v904
        %v1383 = vpop.permute.xlu0 %1382
        %1386 = vset.pattern.permute.xlu0 0
        %1387 = vperm.xlu0 %1386, %v906
        %v1388 = vpop.permute.xlu0 %1387
        %1391 = vset.pattern.permute.xlu0 0
        %1392 = vperm.xlu0 %1391, %v908
        %v1393 = vpop.permute.xlu0 %1392
        %1396 = vset.pattern.permute.xlu0 0
        %1397 = vperm.xlu0 %1396, %v910
        %v1398 = vpop.permute.xlu0 %1397
        %1401 = vset.pattern.permute.xlu0 0
        %1402 = vperm.xlu0 %1401, %v912
        %v1403 = vpop.permute.xlu0 %1402
        %1406 = vset.pattern.permute.xlu0 0
        %1407 = vperm.xlu0 %1406, %v914
        %v1408 = vpop.permute.xlu0 %1407
        %1411 = vset.pattern.permute.xlu0 0
        %1412 = vperm.xlu0 %1411, %v916
        %v1413 = vpop.permute.xlu0 %1412
        %v1415 = vmul.f32 %v1338, %v1319
        %v1416 = vmul.f32 %v1343, %v1320
        %v1417 = vmul.f32 %v1348, %v1321
        %v1418 = vmul.f32 %v1353, %v1322
        %v1419 = vmul.f32 %v1358, %v1323
        %v1420 = vmul.f32 %v1363, %v1324
        %v1421 = vmul.f32 %v1368, %v1325
        %v1422 = vmul.f32 %v1373, %v1326
        %v1423 = vmul.f32 %v1378, %v1327
        %v1424 = vmul.f32 %v1383, %v1328
        %v1425 = vmul.f32 %v1388, %v1329
        %v1426 = vmul.f32 %v1393, %v1330
        %v1427 = vmul.f32 %v1398, %v1331
        %v1428 = vmul.f32 %v1403, %v1332
        %v1429 = vmul.f32 %v1408, %v1333
        %v1430 = vmul.f32 %v1413, %v1334
        %v1431 = vadd.f32 %v1415, %v1192
        %v1432 = vadd.f32 %v1416, %v1195
        %v1433 = vadd.f32 %v1417, %v1200
        %v1434 = vadd.f32 %v1418, %v1203
        %v1435 = vadd.f32 %v1419, %v1208
        %v1436 = vadd.f32 %v1420, %v1211
        %v1437 = vadd.f32 %v1421, %v1216
        %v1438 = vadd.f32 %v1422, %v1219
        %v1439 = vadd.f32 %v1423, %v1224
        %v1440 = vadd.f32 %v1424, %v1227
        %v1441 = vadd.f32 %v1425, %v1232
        %v1442 = vadd.f32 %v1426, %v1235
        %v1443 = vadd.f32 %v1427, %v1240
        %v1444 = vadd.f32 %v1428, %v1243
        %v1445 = vadd.f32 %v1429, %v1248
        %v1446 = vadd.f32 %v1430, %v1251
        %1447 = vst [vmem:[#allocation4] sm:$0xff] %v1431
        %1448 = vst [vmem:[#allocation4 + $0x8] sm:$0xff] %v1432
        %1449 = vst [vmem:[#allocation4 + $0x10] sm:$0xff] %v1433
        %1450 = vst [vmem:[#allocation4 + $0x18] sm:$0xff] %v1434
        %1451 = vst [vmem:[#allocation4 + $0x20] sm:$0xff] %v1435
        %1452 = vst [vmem:[#allocation4 + $0x28] sm:$0xff] %v1436
        %1453 = vst [vmem:[#allocation4 + $0x30] sm:$0xff] %v1437
        %1454 = vst [vmem:[#allocation4 + $0x38] sm:$0xff] %v1438
        %1455 = vst [vmem:[#allocation4 + $0x40] sm:$0xff] %v1439
        %1456 = vst [vmem:[#allocation4 + $0x48] sm:$0xff] %v1440
        %1457 = vst [vmem:[#allocation4 + $0x50] sm:$0xff] %v1441
        %1458 = vst [vmem:[#allocation4 + $0x58] sm:$0xff] %v1442
        %1459 = vst [vmem:[#allocation4 + $0x60] sm:$0xff] %v1443
        %1460 = vst [vmem:[#allocation4 + $0x68] sm:$0xff] %v1444
        %1461 = vst [vmem:[#allocation4 + $0x70] sm:$0xff] %v1445
        %1462 = vst [vmem:[#allocation4 + $0x78] sm:$0xff] %v1446
        %1463 = vst.msk [vmem:[#allocation2] sm:$0xff] %vm1302, %v853
        %1464 = vst.msk [vmem:[#allocation2 + $0x8] sm:$0xff] %vm1302, %v854
        %1465 = vst.msk [vmem:[#allocation2 + $0x10] sm:$0xff] %vm1302, %v855
        %1466 = vst.msk [vmem:[#allocation2 + $0x18] sm:$0xff] %vm1302, %v856
        %1467 = vst.msk [vmem:[#allocation2 + $0x20] sm:$0xff] %vm1302, %v857
        %1468 = vst.msk [vmem:[#allocation2 + $0x28] sm:$0xff] %vm1302, %v858
        %1469 = vst.msk [vmem:[#allocation2 + $0x30] sm:$0xff] %vm1302, %v859
        %1470 = vst.msk [vmem:[#allocation2 + $0x38] sm:$0xff] %vm1302, %v860
        %1471 = vst.msk [vmem:[#allocation2 + $0x40] sm:$0xff] %vm1302, %v861
        %1472 = vst.msk [vmem:[#allocation2 + $0x48] sm:$0xff] %vm1302, %v862
        %1473 = vst.msk [vmem:[#allocation2 + $0x50] sm:$0xff] %vm1302, %v863
        %1474 = vst.msk [vmem:[#allocation2 + $0x58] sm:$0xff] %vm1302, %v864
        %1475 = vst.msk [vmem:[#allocation2 + $0x60] sm:$0xff] %vm1302, %v865
        %1476 = vst.msk [vmem:[#allocation2 + $0x68] sm:$0xff] %vm1302, %v866
        %1477 = vst.msk [vmem:[#allocation2 + $0x70] sm:$0xff] %vm1302, %v867
        %1478 = vst.msk [vmem:[#allocation2 + $0x78] sm:$0xff] %vm1302, %v868
        %p1479 = scmp.eq.s32.totalorder %s29, 1
        // Predicated region
        $region49: #{tpu_custom_call.1} parent=39 // pred_check
          %p1480 = pneg %p1479
        $region50: #{tpu_custom_call.1} parent=39 // pred_check_branch
          %1482 = sbr.rel (%p1480) target = $region52
        $region51: #{tpu_custom_call.1} parent=39 // pred_region
          %v1483 = vld [vmem:[#allocation3] sm:$0xff]
          %v1484 = vld [vmem:[#allocation3 + $0x8] sm:$0xff]
          %v1485 = vld [vmem:[#allocation3 + $0x10] sm:$0xff]
          %v1486 = vld [vmem:[#allocation3 + $0x18] sm:$0xff]
          %v1487 = vld [vmem:[#allocation3 + $0x20] sm:$0xff]
          %v1488 = vld [vmem:[#allocation3 + $0x28] sm:$0xff]
          %v1489 = vld [vmem:[#allocation3 + $0x30] sm:$0xff]
          %v1490 = vld [vmem:[#allocation3 + $0x38] sm:$0xff]
          %v1491 = vld [vmem:[#allocation3 + $0x40] sm:$0xff]
          %v1492 = vld [vmem:[#allocation3 + $0x48] sm:$0xff]
          %v1493 = vld [vmem:[#allocation3 + $0x50] sm:$0xff]
          %v1494 = vld [vmem:[#allocation3 + $0x58] sm:$0xff]
          %v1495 = vld [vmem:[#allocation3 + $0x60] sm:$0xff]
          %v1496 = vld [vmem:[#allocation3 + $0x68] sm:$0xff]
          %v1497 = vld [vmem:[#allocation3 + $0x70] sm:$0xff]
          %v1498 = vld [vmem:[#allocation3 + $0x78] sm:$0xff]
          %v1499 = vrcp.pop %v1483
          %v1500 = vrcp.pop %v1484
          %v1501 = vrcp.pop %v1485
          %v1502 = vrcp.pop %v1486
          %v1503 = vrcp.pop %v1487
          %v1504 = vrcp.pop %v1488
          %v1505 = vrcp.pop %v1489
          %v1506 = vrcp.pop %v1490
          %v1507 = vrcp.pop %v1491
          %v1508 = vrcp.pop %v1492
          %v1509 = vrcp.pop %v1493
          %v1510 = vrcp.pop %v1494
          %v1511 = vrcp.pop %v1495
          %v1512 = vrcp.pop %v1496
          %v1513 = vrcp.pop %v1497
          %v1514 = vrcp.pop %v1498
          %v1515 = vld [vmem:[#allocation4] sm:$0xff]
          %v1516 = vld [vmem:[#allocation4 + $0x8] sm:$0xff]
          %v1517 = vld [vmem:[#allocation4 + $0x10] sm:$0xff]
          %v1518 = vld [vmem:[#allocation4 + $0x18] sm:$0xff]
          %v1519 = vld [vmem:[#allocation4 + $0x20] sm:$0xff]
          %v1520 = vld [vmem:[#allocation4 + $0x28] sm:$0xff]
          %v1521 = vld [vmem:[#allocation4 + $0x30] sm:$0xff]
          %v1522 = vld [vmem:[#allocation4 + $0x38] sm:$0xff]
          %v1523 = vld [vmem:[#allocation4 + $0x40] sm:$0xff]
          %v1524 = vld [vmem:[#allocation4 + $0x48] sm:$0xff]
          %v1525 = vld [vmem:[#allocation4 + $0x50] sm:$0xff]
          %v1526 = vld [vmem:[#allocation4 + $0x58] sm:$0xff]
          %v1527 = vld [vmem:[#allocation4 + $0x60] sm:$0xff]
          %v1528 = vld [vmem:[#allocation4 + $0x68] sm:$0xff]
          %v1529 = vld [vmem:[#allocation4 + $0x70] sm:$0xff]
          %v1530 = vld [vmem:[#allocation4 + $0x78] sm:$0xff]
          %1532 = vset.pattern.permute.xlu0 0
          %1533 = vperm.xlu0 %1532, %v396
          %v1534 = vpop.permute.xlu0 %1533
          %1537 = vset.pattern.permute.xlu0 0
          %1538 = vperm.xlu0 %1537, %v397
          %v1539 = vpop.permute.xlu0 %1538
          %1542 = vset.pattern.permute.xlu0 0
          %1543 = vperm.xlu0 %1542, %v398
          %v1544 = vpop.permute.xlu0 %1543
          %1547 = vset.pattern.permute.xlu0 0
          %1548 = vperm.xlu0 %1547, %v399
          %v1549 = vpop.permute.xlu0 %1548
          %1552 = vset.pattern.permute.xlu0 0
          %1553 = vperm.xlu0 %1552, %v400
          %v1554 = vpop.permute.xlu0 %1553
          %1557 = vset.pattern.permute.xlu0 0
          %1558 = vperm.xlu0 %1557, %v401
          %v1559 = vpop.permute.xlu0 %1558
          %1562 = vset.pattern.permute.xlu0 0
          %1563 = vperm.xlu0 %1562, %v402
          %v1564 = vpop.permute.xlu0 %1563
          %1567 = vset.pattern.permute.xlu0 0
          %1568 = vperm.xlu0 %1567, %v403
          %v1569 = vpop.permute.xlu0 %1568
          %1572 = vset.pattern.permute.xlu0 0
          %1573 = vperm.xlu0 %1572, %v404
          %v1574 = vpop.permute.xlu0 %1573
          %1577 = vset.pattern.permute.xlu0 0
          %1578 = vperm.xlu0 %1577, %v405
          %v1579 = vpop.permute.xlu0 %1578
          %1582 = vset.pattern.permute.xlu0 0
          %1583 = vperm.xlu0 %1582, %v406
          %v1584 = vpop.permute.xlu0 %1583
          %1587 = vset.pattern.permute.xlu0 0
          %1588 = vperm.xlu0 %1587, %v407
          %v1589 = vpop.permute.xlu0 %1588
          %1592 = vset.pattern.permute.xlu0 0
          %1593 = vperm.xlu0 %1592, %v408
          %v1594 = vpop.permute.xlu0 %1593
          %1597 = vset.pattern.permute.xlu0 0
          %1598 = vperm.xlu0 %1597, %v409
          %v1599 = vpop.permute.xlu0 %1598
          %1602 = vset.pattern.permute.xlu0 0
          %1603 = vperm.xlu0 %1602, %v410
          %v1604 = vpop.permute.xlu0 %1603
          %1607 = vset.pattern.permute.xlu0 0
          %1608 = vperm.xlu0 %1607, %v411
          %v1609 = vpop.permute.xlu0 %1608
          %v1611 = vmul.f32 %v1534, %v1515
          %v1612 = vmul.f32 %v1539, %v1516
          %v1613 = vmul.f32 %v1544, %v1517
          %v1614 = vmul.f32 %v1549, %v1518
          %v1615 = vmul.f32 %v1554, %v1519
          %v1616 = vmul.f32 %v1559, %v1520
          %v1617 = vmul.f32 %v1564, %v1521
          %v1618 = vmul.f32 %v1569, %v1522
          %v1619 = vmul.f32 %v1574, %v1523
          %v1620 = vmul.f32 %v1579, %v1524
          %v1621 = vmul.f32 %v1584, %v1525
          %v1622 = vmul.f32 %v1589, %v1526
          %v1623 = vmul.f32 %v1594, %v1527
          %v1624 = vmul.f32 %v1599, %v1528
          %v1625 = vmul.f32 %v1604, %v1529
          %v1626 = vmul.f32 %v1609, %v1530
          %1628 = vset.pattern.permute.xlu0 0
          %1629 = vperm.xlu0 %1628, %v1499
          %v1630 = vpop.permute.xlu0 %1629
          %1633 = vset.pattern.permute.xlu0 0
          %1634 = vperm.xlu0 %1633, %v1500
          %v1635 = vpop.permute.xlu0 %1634
          %1638 = vset.pattern.permute.xlu0 0
          %1639 = vperm.xlu0 %1638, %v1501
          %v1640 = vpop.permute.xlu0 %1639
          %1643 = vset.pattern.permute.xlu0 0
          %1644 = vperm.xlu0 %1643, %v1502
          %v1645 = vpop.permute.xlu0 %1644
          %1648 = vset.pattern.permute.xlu0 0
          %1649 = vperm.xlu0 %1648, %v1503
          %v1650 = vpop.permute.xlu0 %1649
          %1653 = vset.pattern.permute.xlu0 0
          %1654 = vperm.xlu0 %1653, %v1504
          %v1655 = vpop.permute.xlu0 %1654
          %1658 = vset.pattern.permute.xlu0 0
          %1659 = vperm.xlu0 %1658, %v1505
          %v1660 = vpop.permute.xlu0 %1659
          %1663 = vset.pattern.permute.xlu0 0
          %1664 = vperm.xlu0 %1663, %v1506
          %v1665 = vpop.permute.xlu0 %1664
          %1668 = vset.pattern.permute.xlu0 0
          %1669 = vperm.xlu0 %1668, %v1507
          %v1670 = vpop.permute.xlu0 %1669
          %1673 = vset.pattern.permute.xlu0 0
          %1674 = vperm.xlu0 %1673, %v1508
          %v1675 = vpop.permute.xlu0 %1674
          %1678 = vset.pattern.permute.xlu0 0
          %1679 = vperm.xlu0 %1678, %v1509
          %v1680 = vpop.permute.xlu0 %1679
          %1683 = vset.pattern.permute.xlu0 0
          %1684 = vperm.xlu0 %1683, %v1510
          %v1685 = vpop.permute.xlu0 %1684
          %1688 = vset.pattern.permute.xlu0 0
          %1689 = vperm.xlu0 %1688, %v1511
          %v1690 = vpop.permute.xlu0 %1689
          %1693 = vset.pattern.permute.xlu0 0
          %1694 = vperm.xlu0 %1693, %v1512
          %v1695 = vpop.permute.xlu0 %1694
          %1698 = vset.pattern.permute.xlu0 0
          %1699 = vperm.xlu0 %1698, %v1513
          %v1700 = vpop.permute.xlu0 %1699
          %1703 = vset.pattern.permute.xlu0 0
          %1704 = vperm.xlu0 %1703, %v1514
          %v1705 = vpop.permute.xlu0 %1704
          %v1707 = vmul.f32 %v1611, %v1630
          %v1708 = vmul.f32 %v1612, %v1635
          %v1709 = vmul.f32 %v1613, %v1640
          %v1710 = vmul.f32 %v1614, %v1645
          %v1711 = vmul.f32 %v1615, %v1650
          %v1712 = vmul.f32 %v1616, %v1655
          %v1713 = vmul.f32 %v1617, %v1660
          %v1714 = vmul.f32 %v1618, %v1665
          %v1715 = vmul.f32 %v1619, %v1670
          %v1716 = vmul.f32 %v1620, %v1675
          %v1717 = vmul.f32 %v1621, %v1680
          %v1718 = vmul.f32 %v1622, %v1685
          %v1719 = vmul.f32 %v1623, %v1690
          %v1720 = vmul.f32 %v1624, %v1695
          %v1721 = vmul.f32 %v1625, %v1700
          %v1722 = vmul.f32 %v1626, %v1705
          %1723 = vst [vmem:[%s358] sm:$0xff] %v1707
          %1724 = vst [vmem:[%s358 + $0x8] sm:$0xff] %v1708
          %1725 = vst [vmem:[%s358 + $0x10] sm:$0xff] %v1709
          %1726 = vst [vmem:[%s358 + $0x18] sm:$0xff] %v1710
          %1727 = vst [vmem:[%s358 + $0x20] sm:$0xff] %v1711
          %1728 = vst [vmem:[%s358 + $0x28] sm:$0xff] %v1712
          %1729 = vst [vmem:[%s358 + $0x30] sm:$0xff] %v1713
          %1730 = vst [vmem:[%s358 + $0x38] sm:$0xff] %v1714
          %1731 = vst [vmem:[%s358 + $0x40] sm:$0xff] %v1715
          %1732 = vst [vmem:[%s358 + $0x48] sm:$0xff] %v1716
          %1733 = vst [vmem:[%s358 + $0x50] sm:$0xff] %v1717
          %1734 = vst [vmem:[%s358 + $0x58] sm:$0xff] %v1718
          %1735 = vst [vmem:[%s358 + $0x60] sm:$0xff] %v1719
          %1736 = vst [vmem:[%s358 + $0x68] sm:$0xff] %v1720
          %1737 = vst [vmem:[%s358 + $0x70] sm:$0xff] %v1721
          %1738 = vst [vmem:[%s358 + $0x78] sm:$0xff] %v1722
        $region52: #{tpu_custom_call.1} parent=39 // pred_fallthru
          _
        %s1739 = sand.u32 %s189, 1
        %s1740 = scalar_lea.sflag [#allocation8], %s1739
        %s1741 = sand.u32 %s189, 1
        %s1742 = smul.addr %s1741, 128
        %s1743 = scalar_lea.vmem [#allocation9], %s1742
        // Predicated region
        $region53: #{tpu_custom_call.1} parent=39 // pred_check
          %p1744 = pneg %p199
        $region54: #{tpu_custom_call.1} parent=39 // pred_check_branch
          %1746 = sbr.rel (%p1744) target = $region56
        $region55: #{tpu_custom_call.1} parent=39 // pred_region
          %s1747 = smul.u32 16, %s28
          %s1749 = ssub.s32 2048, 2048
          %1750 = vsyncadd %s1740, %s1749
          %s1751 = smul.addr %s27, 32
          %s1752 = sadd.s32 %s1747, %s1751
          %s1753 = smul.addr %s1752, 128
          %s1754 = scalar_lea.hbm %s5, %s1753
          %s1755 = sshll.u32 %s1743, 4
          %s1756 = int_to_ptr.vmem [resolvable:$true] %s1755
          %1761 = dma.vmem_to_hbm [thread:$0]  %s1756, 2048, %s1754, %s1740, 128, 128, 8
        $region56: #{tpu_custom_call.1} parent=39 // pred_fallthru
          _
      $region40: #{tpu_custom_call.1} parent=5 // pred_fallthru
        _
      %p1762 = scmp.le.s32.totalorder 2, %s17
      // Predicated region
      $region57: #{tpu_custom_call.1} parent=5 // pred_check
        %p1763 = pneg %p1762
      $region58: #{tpu_custom_call.1} parent=5 // pred_check_branch
        %1765 = sbr.rel (%p1763) target = $region60
      $region59: #{tpu_custom_call.1} parent=5 // pred_region
        %s1766 = ssub.s32 %s17, 2
        // Predicated region
        $region61: #{tpu_custom_call.1} parent=59 // pred_check
          %p1767 = pneg %p205
        $region62: #{tpu_custom_call.1} parent=59 // pred_check_branch
          %1769 = sbr.rel (%p1767) target = $region64
        $region63: #{tpu_custom_call.1} parent=59 // pred_region
          %s1770 = sand.u32 %s190, 1
          %s1771 = scalar_lea.sflag [#allocation8], %s1770
          %s1772 = sand.u32 %s190, 1
          %s1773 = smul.addr %s1772, 128
          %s1774 = scalar_lea.vmem [#allocation9], %s1773
          %1775 = dma.done %s1771, 2048
        $region64: #{tpu_custom_call.1} parent=59 // pred_fallthru
          _
      $region60: #{tpu_custom_call.1} parent=5 // pred_fallthru
        _
    $region6: #{tpu_custom_call.1} parent=1 // loop_footer
      %s21 = sadd.s32 1, %s17
    $region7: #{tpu_custom_call.1} parent=1 // loop_footer_branch
      %16 = sbr.rel target = $region3
    $region8: #{tpu_custom_call.1} parent=1 // loop_exit
      _
    %1776 = vsyncpa [#allocation7], 1
    %s1777 = scalar_lea.sflag [#allocation7], 1
    %1778 = vsyncpa %s1777, 1
    %1779 = vsyncpa [#allocation8], 1
    %s1780 = scalar_lea.sflag [#allocation8], 1
    %1781 = vsyncpa %s1780, 1

</llo_original>
